<compile_context>
chip_gen: v7x
topology: tpu7x:2x2x1
jax: 0.10.0
libtpu: 0.0.40
codegen_flags: <defaults>
</compile_context>

<pallas_src>
import jax
import jax.numpy as jnp
from jax.experimental import pallas as pl
from jax.experimental.pallas import tpu as pltpu


# -----------------------------------------------------------------------------
# Kernel
# -----------------------------------------------------------------------------
def _actor_kernel(x_ref, h0_ref,
                  w1_ref, b1_ref,
                  wihc_ref, whhc_ref, gbias_ref, bhhn_ref,
                  w2_ref, b2_ref,
                  w3_ref, b3_ref,
                  out_ref, hout_ref):
    B, H = h0_ref.shape
    T = x_ref.shape[0] // B          # rows are time-major: row = t*B + b

    def mm(a, b):
        return jnp.dot(a, b, preferred_element_type=jnp.float32)

    # ---- Phase 1: all h-independent work as two large MXU matmuls -----------
    x1 = jnp.tanh(mm(x_ref[...], w1_ref[...]) + b1_ref[...])        # (T*B, H)
    # fused input projection for (r, z, n); bih_r+bhh_r, bih_z+bhh_z, bih_n
    # are pre-folded into gbias in the wrapper.
    xg = mm(x1, wihc_ref[...]) + gbias_ref[...]                     # (T*B, 3H)

    whh_cat = whhc_ref[...]                                         # (H, 3H)
    bhh_n = jnp.broadcast_to(bhhn_ref[...], (B, H))                 # hoisted bcast

    # ---- Phase 2: serial GRU recurrence (statically unrolled, T is small) ---
    h = h0_ref[...]                                                 # (B, H)
    hs_list = []                                                    # stays in vregs
    for t in range(T):
        xg_t = xg[t * B:(t + 1) * B, :]                             # (B, 3H) static slice
        hg = mm(h, whh_cat)                                         # one fused MXU op / step
        rz = jax.nn.sigmoid(xg_t[:, :2 * H] + hg[:, :2 * H])        # fused r|z (one EUP push)
        r = rz[:, :H]
        z = rz[:, H:]
        n = jnp.tanh(xg_t[:, 2 * H:] + r * (hg[:, 2 * H:] + bhh_n))
        h = (1.0 - z) * n + z * h                                   # (B, H)
        hs_list.append(h)
    hout_ref[...] = h

    # time-major (T*B, H): concat of per-step (B, H) blocks, no VMEM roundtrip
    g = jnp.concatenate(hs_list, axis=0)

    # ---- Phase 3: deferred head: two batched matmuls + one dense store ------
    y2 = jnp.tanh(mm(g, w2_ref[...]) + b2_ref[...])
    out_ref[...] = jnp.tanh(mm(y2, w3_ref[...]) + b3_ref[...])      # (T*B, A)


# -----------------------------------------------------------------------------
# Wrapper
# -----------------------------------------------------------------------------
@jax.jit
def gaussian_actor_forward(x, h, params):
    """x: (B, T, D_in) f32; h: (1, B, H) f32. Returns (mean (B,T,A), h_ (1,B,H))."""
    B, T, D = x.shape
    H = params["w2"].shape[0]
    A = params["w3"].shape[1]

    # time-major flattened layout for the kernel (row = t*B + b)
    x_tm = jnp.swapaxes(x, 0, 1).reshape(T * B, D)
    h0 = h[0]                                                       # (B, H)

    # weight fusion / bias pre-folding (pure layout plumbing, done once per call)
    wih, whh, bih, bhh = params["wih"], params["whh"], params["bih"], params["bhh"]
    wih_cat = jnp.concatenate([wih[0], wih[1], wih[2]], axis=1)     # (H, 3H)
    whh_cat = jnp.concatenate([whh[0], whh[1], whh[2]], axis=1)     # (H, 3H)
    gbias = jnp.concatenate([bih[0] + bhh[0],                       # r
                             bih[1] + bhh[1],                       # z
                             bih[2]], axis=1)                       # n (bhh_n stays separate)
    bhh_n = bhh[2]                                                  # (1, H)

    flops = 2 * B * T * (D * H + 6 * H * H + H * H + H * A)
    transcendentals = B * T * (5 * H + A)
    bytes_accessed = 4 * (B * T * D + B * T * A + 2 * B * H
                          + D * H + 7 * H * H + H * A + 6 * H + A)

    vmem = pl.BlockSpec(memory_space=pltpu.MemorySpace.VMEM)
    out_tm, h_out = pl.pallas_call(
        _actor_kernel,
        out_shape=(jax.ShapeDtypeStruct((T * B, A), jnp.float32),
                   jax.ShapeDtypeStruct((B, H), jnp.float32)),
        in_specs=[vmem] * 12,
        out_specs=(vmem, vmem),
        cost_estimate=pl.CostEstimate(flops=flops,
                                      transcendentals=transcendentals,
                                      bytes_accessed=bytes_accessed),
    )(x_tm, h0,
      params["w1"], params["b1"],
      wih_cat, whh_cat, gbias, bhh_n,
      params["w2"], params["b2"],
      params["w3"], params["b3"])

    out = jnp.swapaxes(out_tm.reshape(T, B, A), 0, 1)               # (B, T, A)
    return out, h_out[None]                                         # (B,T,A), (1,B,H)


# -----------------------------------------------------------------------------
# Deterministic parameter init (mirrors module __init__ shapes; values synthetic)
# -----------------------------------------------------------------------------
def init_params(key, in_dim, h_size, a_dim):
    keys = jax.random.split(key, 8)
    gain = 5.0 / 3.0  # calculate_gain('tanh')

    def xavier(k, fan_in, fan_out):
        bound = gain * jnp.sqrt(6.0 / (fan_in + fan_out))
        return jax.random.uniform(k, (fan_in, fan_out), jnp.float32, -bound, bound)

    gru_bound = 1.0 / jnp.sqrt(h_size)

    def gru_w(k):  # 3 gate matrices (r, z, n), stored transposed: (H_in, H_out)
        return jax.random.uniform(k, (3, h_size, h_size), jnp.float32,
                                  -gru_bound, gru_bound)

    def gru_b(k):
        return jax.random.uniform(k, (3, 1, h_size), jnp.float32,
                                  -gru_bound, gru_bound)

    return {
        "w1": xavier(keys[0], in_dim, h_size),
        "b1": jnp.zeros((1, h_size), jnp.float32),
        "wih": gru_w(keys[1]),
        "whh": gru_w(keys[2]),
        "bih": gru_b(keys[3]),
        "bhh": gru_b(keys[4]),
        "w2": xavier(keys[5], h_size, h_size),
        "b2": jnp.zeros((1, h_size), jnp.float32),
        "w3": xavier(keys[6], h_size, a_dim),
        "b3": jnp.zeros((1, a_dim), jnp.float32),
        # logstd exists on the module but is intentionally unused by forward()
        # (only get_action uses it); kept for parameter-shape parity.
        "logstd": -jnp.zeros((a_dim,), jnp.float32),
    }


# Pure-JAX reference (same math, PyTorch GRU gate order) for correctness check.
def _reference_forward(x, h, p):
    B, T, _ = x.shape
    x1 = jnp.tanh(x @ p["w1"] + p["b1"])                     # (B, T, H)
    hs = h[0]
    outs = []
    for t in range(T):
        xt = x1[:, t, :]
        r = jax.nn.sigmoid(xt @ p["wih"][0] + p["bih"][0] + hs @ p["whh"][0] + p["bhh"][0])
        z = jax.nn.sigmoid(xt @ p["wih"][1] + p["bih"][1] + hs @ p["whh"][1] + p["bhh"][1])
        n = jnp.tanh(xt @ p["wih"][2] + p["bih"][2] + r * (hs @ p["whh"][2] + p["bhh"][2]))
        hs = (1.0 - z) * n + z * hs
        outs.append(hs)
    g = jnp.stack(outs, axis=1)                              # (B, T, H)
    y2 = jnp.tanh(g @ p["w2"] + p["b2"])
    y3 = jnp.tanh(y2 @ p["w3"] + p["b3"])
    return y3, hs[None]


if __name__ == "__main__":
    # Shapes implied by forward(): obs_dim=20, act_dim=4 -> in_dim=24,
    # h_size=32, seq len T=8, batch B=2.
    B, T = 2, 8
    obs_dim, act_dim = 20, 4
    in_dim = obs_dim + act_dim
    h_size = 32

    key = jax.random.PRNGKey(0)
    k_param, k_x = jax.random.split(key)
    params = init_params(k_param, in_dim, h_size, act_dim)

    x = jax.random.normal(k_x, (B, T, in_dim), jnp.float32)
    h0 = jnp.zeros((1, B, h_size), jnp.float32)   # h=None in PyTorch -> zeros

    mean, h_new = gaussian_actor_forward(x, h0, params)
    mean = jax.block_until_ready(mean)
    h_new = jax.block_until_ready(h_new)

    assert mean.shape == (B, T, act_dim)
    assert h_new.shape == (1, B, h_size)

    ref_mean, ref_h = _reference_forward(x, h0, params)
    assert jnp.allclose(mean, ref_mean, atol=1e-4, rtol=1e-4)
    assert jnp.allclose(h_new, ref_h, atol=1e-4, rtol=1e-4)

    print("KERNEL_OK")
</pallas_src>

<mosaic_0001>
module attributes {stable_mosaic.version = 11 : i64} {
  func.func @_actor_kernel(%arg0: memref<16x24xf32, #tpu.memory_space<vmem>>, %arg1: memref<2x32xf32, #tpu.memory_space<vmem>>, %arg2: memref<24x32xf32, #tpu.memory_space<vmem>>, %arg3: memref<1x32xf32, #tpu.memory_space<vmem>>, %arg4: memref<32x96xf32, #tpu.memory_space<vmem>>, %arg5: memref<32x96xf32, #tpu.memory_space<vmem>>, %arg6: memref<1x96xf32, #tpu.memory_space<vmem>>, %arg7: memref<1x32xf32, #tpu.memory_space<vmem>>, %arg8: memref<32x32xf32, #tpu.memory_space<vmem>>, %arg9: memref<1x32xf32, #tpu.memory_space<vmem>>, %arg10: memref<32x4xf32, #tpu.memory_space<vmem>>, %arg11: memref<1x4xf32, #tpu.memory_space<vmem>>, %arg12: memref<16x4xf32, #tpu.memory_space<vmem>>, %arg13: memref<2x32xf32, #tpu.memory_space<vmem>>) attributes {dimension_semantics = [], scalar_prefetch = 0 : i64, scratch_operands = 0 : i64, tpu.core_type = #tpu.core_type<tc>} {
    %c0 = arith.constant 0 : index
    %c0_0 = arith.constant 0 : index
    %0 = vector.load %arg0[%c0, %c0_0] : memref<16x24xf32, #tpu.memory_space<vmem>>, vector<16x24xf32>
    %c0_1 = arith.constant 0 : index
    %c0_2 = arith.constant 0 : index
    %1 = vector.load %arg2[%c0_1, %c0_2] : memref<24x32xf32, #tpu.memory_space<vmem>>, vector<24x32xf32>
    %cst = arith.constant dense<0.000000e+00> : vector<16x32xf32>
    %2 = tpu.matmul %0, %1, %cst {dimension_numbers = #tpu.dot_dimension_numbers<[1], [0], [0], [1], [0, 0, 1, 1], [], []>} : vector<16x24xf32>, vector<24x32xf32>, vector<16x32xf32> -> vector<16x32xf32>
    %c0_3 = arith.constant 0 : index
    %c0_4 = arith.constant 0 : index
    %3 = vector.load %arg3[%c0_3, %c0_4] : memref<1x32xf32, #tpu.memory_space<vmem>>, vector<1x32xf32>
    %4 = vector.broadcast %3 : vector<1x32xf32> to vector<16x32xf32>
    %5 = arith.addf %2, %4 : vector<16x32xf32>
    %6 = math.tanh %5 : vector<16x32xf32>
    %c0_5 = arith.constant 0 : index
    %c0_6 = arith.constant 0 : index
    %7 = vector.load %arg4[%c0_5, %c0_6] : memref<32x96xf32, #tpu.memory_space<vmem>>, vector<32x96xf32>
    %cst_7 = arith.constant dense<0.000000e+00> : vector<16x96xf32>
    %8 = tpu.matmul %6, %7, %cst_7 {dimension_numbers = #tpu.dot_dimension_numbers<[1], [0], [0], [1], [0, 0, 1, 1], [], []>} : vector<16x32xf32>, vector<32x96xf32>, vector<16x96xf32> -> vector<16x96xf32>
    %c0_8 = arith.constant 0 : index
    %c0_9 = arith.constant 0 : index
    %9 = vector.load %arg6[%c0_8, %c0_9] : memref<1x96xf32, #tpu.memory_space<vmem>>, vector<1x96xf32>
    %10 = vector.broadcast %9 : vector<1x96xf32> to vector<16x96xf32>
    %11 = arith.addf %8, %10 : vector<16x96xf32>
    %c0_10 = arith.constant 0 : index
    %c0_11 = arith.constant 0 : index
    %12 = vector.load %arg5[%c0_10, %c0_11] : memref<32x96xf32, #tpu.memory_space<vmem>>, vector<32x96xf32>
    %c0_12 = arith.constant 0 : index
    %c0_13 = arith.constant 0 : index
    %13 = vector.load %arg7[%c0_12, %c0_13] : memref<1x32xf32, #tpu.memory_space<vmem>>, vector<1x32xf32>
    %14 = vector.shape_cast %13 : vector<1x32xf32> to vector<1x32xf32>
    %15 = vector.broadcast %14 : vector<1x32xf32> to vector<2x32xf32>
    %c0_14 = arith.constant 0 : index
    %c0_15 = arith.constant 0 : index
    %16 = vector.load %arg1[%c0_14, %c0_15] : memref<2x32xf32, #tpu.memory_space<vmem>>, vector<2x32xf32>
    %17 = vector.extract_strided_slice %11 {offsets = [0, 0], sizes = [2, 96], strides = [1, 1]} : vector<16x96xf32> to vector<2x96xf32>
    %cst_16 = arith.constant dense<0.000000e+00> : vector<2x96xf32>
    %18 = tpu.matmul %16, %12, %cst_16 {dimension_numbers = #tpu.dot_dimension_numbers<[1], [0], [0], [1], [0, 0, 1, 1], [], []>} : vector<2x32xf32>, vector<32x96xf32>, vector<2x96xf32> -> vector<2x96xf32>
    %19 = vector.extract_strided_slice %17 {offsets = [0, 0], sizes = [2, 64], strides = [1, 1]} : vector<2x96xf32> to vector<2x64xf32>
    %20 = vector.extract_strided_slice %18 {offsets = [0, 0], sizes = [2, 64], strides = [1, 1]} : vector<2x96xf32> to vector<2x64xf32>
    %21 = arith.addf %19, %20 : vector<2x64xf32>
    %22 = arith.negf %21 : vector<2x64xf32>
    %23 = math.exp %22 : vector<2x64xf32>
    %cst_17 = arith.constant 1.000000e+00 : f32
    %24 = vector.broadcast %cst_17 : f32 to vector<2x64xf32>
    %25 = arith.addf %24, %23 : vector<2x64xf32>
    %26 = arith.divf %24, %25 : vector<2x64xf32>
    %27 = vector.extract_strided_slice %26 {offsets = [0, 0], sizes = [2, 32], strides = [1, 1]} : vector<2x64xf32> to vector<2x32xf32>
    %28 = vector.extract_strided_slice %26 {offsets = [0, 32], sizes = [2, 32], strides = [1, 1]} : vector<2x64xf32> to vector<2x32xf32>
    %29 = vector.extract_strided_slice %17 {offsets = [0, 64], sizes = [2, 32], strides = [1, 1]} : vector<2x96xf32> to vector<2x32xf32>
    %30 = vector.extract_strided_slice %18 {offsets = [0, 64], sizes = [2, 32], strides = [1, 1]} : vector<2x96xf32> to vector<2x32xf32>
    %31 = arith.addf %30, %15 : vector<2x32xf32>
    %32 = arith.mulf %27, %31 : vector<2x32xf32>
    %33 = arith.addf %29, %32 : vector<2x32xf32>
    %34 = math.tanh %33 : vector<2x32xf32>
    %cst_18 = arith.constant 1.000000e+00 : f32
    %35 = vector.broadcast %cst_18 : f32 to vector<2x32xf32>
    %36 = arith.subf %35, %28 : vector<2x32xf32>
    %37 = arith.mulf %36, %34 : vector<2x32xf32>
    %38 = arith.mulf %28, %16 : vector<2x32xf32>
    %39 = arith.addf %37, %38 : vector<2x32xf32>
    %40 = vector.extract_strided_slice %11 {offsets = [2, 0], sizes = [2, 96], strides = [1, 1]} : vector<16x96xf32> to vector<2x96xf32>
    %cst_19 = arith.constant dense<0.000000e+00> : vector<2x96xf32>
    %41 = tpu.matmul %39, %12, %cst_19 {dimension_numbers = #tpu.dot_dimension_numbers<[1], [0], [0], [1], [0, 0, 1, 1], [], []>} : vector<2x32xf32>, vector<32x96xf32>, vector<2x96xf32> -> vector<2x96xf32>
    %42 = vector.extract_strided_slice %40 {offsets = [0, 0], sizes = [2, 64], strides = [1, 1]} : vector<2x96xf32> to vector<2x64xf32>
    %43 = vector.extract_strided_slice %41 {offsets = [0, 0], sizes = [2, 64], strides = [1, 1]} : vector<2x96xf32> to vector<2x64xf32>
    %44 = arith.addf %42, %43 : vector<2x64xf32>
    %45 = arith.negf %44 : vector<2x64xf32>
    %46 = math.exp %45 : vector<2x64xf32>
    %cst_20 = arith.constant 1.000000e+00 : f32
    %47 = vector.broadcast %cst_20 : f32 to vector<2x64xf32>
    %48 = arith.addf %47, %46 : vector<2x64xf32>
    %49 = arith.divf %47, %48 : vector<2x64xf32>
    %50 = vector.extract_strided_slice %49 {offsets = [0, 0], sizes = [2, 32], strides = [1, 1]} : vector<2x64xf32> to vector<2x32xf32>
    %51 = vector.extract_strided_slice %49 {offsets = [0, 32], sizes = [2, 32], strides = [1, 1]} : vector<2x64xf32> to vector<2x32xf32>
    %52 = vector.extract_strided_slice %40 {offsets = [0, 64], sizes = [2, 32], strides = [1, 1]} : vector<2x96xf32> to vector<2x32xf32>
    %53 = vector.extract_strided_slice %41 {offsets = [0, 64], sizes = [2, 32], strides = [1, 1]} : vector<2x96xf32> to vector<2x32xf32>
    %54 = arith.addf %53, %15 : vector<2x32xf32>
    %55 = arith.mulf %50, %54 : vector<2x32xf32>
    %56 = arith.addf %52, %55 : vector<2x32xf32>
    %57 = math.tanh %56 : vector<2x32xf32>
    %cst_21 = arith.constant 1.000000e+00 : f32
    %58 = vector.broadcast %cst_21 : f32 to vector<2x32xf32>
    %59 = arith.subf %58, %51 : vector<2x32xf32>
    %60 = arith.mulf %59, %57 : vector<2x32xf32>
    %61 = arith.mulf %51, %39 : vector<2x32xf32>
    %62 = arith.addf %60, %61 : vector<2x32xf32>
    %63 = vector.extract_strided_slice %11 {offsets = [4, 0], sizes = [2, 96], strides = [1, 1]} : vector<16x96xf32> to vector<2x96xf32>
    %cst_22 = arith.constant dense<0.000000e+00> : vector<2x96xf32>
    %64 = tpu.matmul %62, %12, %cst_22 {dimension_numbers = #tpu.dot_dimension_numbers<[1], [0], [0], [1], [0, 0, 1, 1], [], []>} : vector<2x32xf32>, vector<32x96xf32>, vector<2x96xf32> -> vector<2x96xf32>
    %65 = vector.extract_strided_slice %63 {offsets = [0, 0], sizes = [2, 64], strides = [1, 1]} : vector<2x96xf32> to vector<2x64xf32>
    %66 = vector.extract_strided_slice %64 {offsets = [0, 0], sizes = [2, 64], strides = [1, 1]} : vector<2x96xf32> to vector<2x64xf32>
    %67 = arith.addf %65, %66 : vector<2x64xf32>
    %68 = arith.negf %67 : vector<2x64xf32>
    %69 = math.exp %68 : vector<2x64xf32>
    %cst_23 = arith.constant 1.000000e+00 : f32
    %70 = vector.broadcast %cst_23 : f32 to vector<2x64xf32>
    %71 = arith.addf %70, %69 : vector<2x64xf32>
    %72 = arith.divf %70, %71 : vector<2x64xf32>
    %73 = vector.extract_strided_slice %72 {offsets = [0, 0], sizes = [2, 32], strides = [1, 1]} : vector<2x64xf32> to vector<2x32xf32>
    %74 = vector.extract_strided_slice %72 {offsets = [0, 32], sizes = [2, 32], strides = [1, 1]} : vector<2x64xf32> to vector<2x32xf32>
    %75 = vector.extract_strided_slice %63 {offsets = [0, 64], sizes = [2, 32], strides = [1, 1]} : vector<2x96xf32> to vector<2x32xf32>
    %76 = vector.extract_strided_slice %64 {offsets = [0, 64], sizes = [2, 32], strides = [1, 1]} : vector<2x96xf32> to vector<2x32xf32>
    %77 = arith.addf %76, %15 : vector<2x32xf32>
    %78 = arith.mulf %73, %77 : vector<2x32xf32>
    %79 = arith.addf %75, %78 : vector<2x32xf32>
    %80 = math.tanh %79 : vector<2x32xf32>
    %cst_24 = arith.constant 1.000000e+00 : f32
    %81 = vector.broadcast %cst_24 : f32 to vector<2x32xf32>
    %82 = arith.subf %81, %74 : vector<2x32xf32>
    %83 = arith.mulf %82, %80 : vector<2x32xf32>
    %84 = arith.mulf %74, %62 : vector<2x32xf32>
    %85 = arith.addf %83, %84 : vector<2x32xf32>
    %86 = vector.extract_strided_slice %11 {offsets = [6, 0], sizes = [2, 96], strides = [1, 1]} : vector<16x96xf32> to vector<2x96xf32>
    %cst_25 = arith.constant dense<0.000000e+00> : vector<2x96xf32>
    %87 = tpu.matmul %85, %12, %cst_25 {dimension_numbers = #tpu.dot_dimension_numbers<[1], [0], [0], [1], [0, 0, 1, 1], [], []>} : vector<2x32xf32>, vector<32x96xf32>, vector<2x96xf32> -> vector<2x96xf32>
    %88 = vector.extract_strided_slice %86 {offsets = [0, 0], sizes = [2, 64], strides = [1, 1]} : vector<2x96xf32> to vector<2x64xf32>
    %89 = vector.extract_strided_slice %87 {offsets = [0, 0], sizes = [2, 64], strides = [1, 1]} : vector<2x96xf32> to vector<2x64xf32>
    %90 = arith.addf %88, %89 : vector<2x64xf32>
    %91 = arith.negf %90 : vector<2x64xf32>
    %92 = math.exp %91 : vector<2x64xf32>
    %cst_26 = arith.constant 1.000000e+00 : f32
    %93 = vector.broadcast %cst_26 : f32 to vector<2x64xf32>
    %94 = arith.addf %93, %92 : vector<2x64xf32>
    %95 = arith.divf %93, %94 : vector<2x64xf32>
    %96 = vector.extract_strided_slice %95 {offsets = [0, 0], sizes = [2, 32], strides = [1, 1]} : vector<2x64xf32> to vector<2x32xf32>
    %97 = vector.extract_strided_slice %95 {offsets = [0, 32], sizes = [2, 32], strides = [1, 1]} : vector<2x64xf32> to vector<2x32xf32>
    %98 = vector.extract_strided_slice %86 {offsets = [0, 64], sizes = [2, 32], strides = [1, 1]} : vector<2x96xf32> to vector<2x32xf32>
    %99 = vector.extract_strided_slice %87 {offsets = [0, 64], sizes = [2, 32], strides = [1, 1]} : vector<2x96xf32> to vector<2x32xf32>
    %100 = arith.addf %99, %15 : vector<2x32xf32>
    %101 = arith.mulf %96, %100 : vector<2x32xf32>
    %102 = arith.addf %98, %101 : vector<2x32xf32>
    %103 = math.tanh %102 : vector<2x32xf32>
    %cst_27 = arith.constant 1.000000e+00 : f32
    %104 = vector.broadcast %cst_27 : f32 to vector<2x32xf32>
    %105 = arith.subf %104, %97 : vector<2x32xf32>
    %106 = arith.mulf %105, %103 : vector<2x32xf32>
    %107 = arith.mulf %97, %85 : vector<2x32xf32>
    %108 = arith.addf %106, %107 : vector<2x32xf32>
    %109 = vector.extract_strided_slice %11 {offsets = [8, 0], sizes = [2, 96], strides = [1, 1]} : vector<16x96xf32> to vector<2x96xf32>
    %cst_28 = arith.constant dense<0.000000e+00> : vector<2x96xf32>
    %110 = tpu.matmul %108, %12, %cst_28 {dimension_numbers = #tpu.dot_dimension_numbers<[1], [0], [0], [1], [0, 0, 1, 1], [], []>} : vector<2x32xf32>, vector<32x96xf32>, vector<2x96xf32> -> vector<2x96xf32>
    %111 = vector.extract_strided_slice %109 {offsets = [0, 0], sizes = [2, 64], strides = [1, 1]} : vector<2x96xf32> to vector<2x64xf32>
    %112 = vector.extract_strided_slice %110 {offsets = [0, 0], sizes = [2, 64], strides = [1, 1]} : vector<2x96xf32> to vector<2x64xf32>
    %113 = arith.addf %111, %112 : vector<2x64xf32>
    %114 = arith.negf %113 : vector<2x64xf32>
    %115 = math.exp %114 : vector<2x64xf32>
    %cst_29 = arith.constant 1.000000e+00 : f32
    %116 = vector.broadcast %cst_29 : f32 to vector<2x64xf32>
    %117 = arith.addf %116, %115 : vector<2x64xf32>
    %118 = arith.divf %116, %117 : vector<2x64xf32>
    %119 = vector.extract_strided_slice %118 {offsets = [0, 0], sizes = [2, 32], strides = [1, 1]} : vector<2x64xf32> to vector<2x32xf32>
    %120 = vector.extract_strided_slice %118 {offsets = [0, 32], sizes = [2, 32], strides = [1, 1]} : vector<2x64xf32> to vector<2x32xf32>
    %121 = vector.extract_strided_slice %109 {offsets = [0, 64], sizes = [2, 32], strides = [1, 1]} : vector<2x96xf32> to vector<2x32xf32>
    %122 = vector.extract_strided_slice %110 {offsets = [0, 64], sizes = [2, 32], strides = [1, 1]} : vector<2x96xf32> to vector<2x32xf32>
    %123 = arith.addf %122, %15 : vector<2x32xf32>
    %124 = arith.mulf %119, %123 : vector<2x32xf32>
    %125 = arith.addf %121, %124 : vector<2x32xf32>
    %126 = math.tanh %125 : vector<2x32xf32>
    %cst_30 = arith.constant 1.000000e+00 : f32
    %127 = vector.broadcast %cst_30 : f32 to vector<2x32xf32>
    %128 = arith.subf %127, %120 : vector<2x32xf32>
    %129 = arith.mulf %128, %126 : vector<2x32xf32>
    %130 = arith.mulf %120, %108 : vector<2x32xf32>
    %131 = arith.addf %129, %130 : vector<2x32xf32>
    %132 = vector.extract_strided_slice %11 {offsets = [10, 0], sizes = [2, 96], strides = [1, 1]} : vector<16x96xf32> to vector<2x96xf32>
    %cst_31 = arith.constant dense<0.000000e+00> : vector<2x96xf32>
    %133 = tpu.matmul %131, %12, %cst_31 {dimension_numbers = #tpu.dot_dimension_numbers<[1], [0], [0], [1], [0, 0, 1, 1], [], []>} : vector<2x32xf32>, vector<32x96xf32>, vector<2x96xf32> -> vector<2x96xf32>
    %134 = vector.extract_strided_slice %132 {offsets = [0, 0], sizes = [2, 64], strides = [1, 1]} : vector<2x96xf32> to vector<2x64xf32>
    %135 = vector.extract_strided_slice %133 {offsets = [0, 0], sizes = [2, 64], strides = [1, 1]} : vector<2x96xf32> to vector<2x64xf32>
    %136 = arith.addf %134, %135 : vector<2x64xf32>
    %137 = arith.negf %136 : vector<2x64xf32>
    %138 = math.exp %137 : vector<2x64xf32>
    %cst_32 = arith.constant 1.000000e+00 : f32
    %139 = vector.broadcast %cst_32 : f32 to vector<2x64xf32>
    %140 = arith.addf %139, %138 : vector<2x64xf32>
    %141 = arith.divf %139, %140 : vector<2x64xf32>
    %142 = vector.extract_strided_slice %141 {offsets = [0, 0], sizes = [2, 32], strides = [1, 1]} : vector<2x64xf32> to vector<2x32xf32>
    %143 = vector.extract_strided_slice %141 {offsets = [0, 32], sizes = [2, 32], strides = [1, 1]} : vector<2x64xf32> to vector<2x32xf32>
    %144 = vector.extract_strided_slice %132 {offsets = [0, 64], sizes = [2, 32], strides = [1, 1]} : vector<2x96xf32> to vector<2x32xf32>
    %145 = vector.extract_strided_slice %133 {offsets = [0, 64], sizes = [2, 32], strides = [1, 1]} : vector<2x96xf32> to vector<2x32xf32>
    %146 = arith.addf %145, %15 : vector<2x32xf32>
    %147 = arith.mulf %142, %146 : vector<2x32xf32>
    %148 = arith.addf %144, %147 : vector<2x32xf32>
    %149 = math.tanh %148 : vector<2x32xf32>
    %cst_33 = arith.constant 1.000000e+00 : f32
    %150 = vector.broadcast %cst_33 : f32 to vector<2x32xf32>
    %151 = arith.subf %150, %143 : vector<2x32xf32>
    %152 = arith.mulf %151, %149 : vector<2x32xf32>
    %153 = arith.mulf %143, %131 : vector<2x32xf32>
    %154 = arith.addf %152, %153 : vector<2x32xf32>
    %155 = vector.extract_strided_slice %11 {offsets = [12, 0], sizes = [2, 96], strides = [1, 1]} : vector<16x96xf32> to vector<2x96xf32>
    %cst_34 = arith.constant dense<0.000000e+00> : vector<2x96xf32>
    %156 = tpu.matmul %154, %12, %cst_34 {dimension_numbers = #tpu.dot_dimension_numbers<[1], [0], [0], [1], [0, 0, 1, 1], [], []>} : vector<2x32xf32>, vector<32x96xf32>, vector<2x96xf32> -> vector<2x96xf32>
    %157 = vector.extract_strided_slice %155 {offsets = [0, 0], sizes = [2, 64], strides = [1, 1]} : vector<2x96xf32> to vector<2x64xf32>
    %158 = vector.extract_strided_slice %156 {offsets = [0, 0], sizes = [2, 64], strides = [1, 1]} : vector<2x96xf32> to vector<2x64xf32>
    %159 = arith.addf %157, %158 : vector<2x64xf32>
    %160 = arith.negf %159 : vector<2x64xf32>
    %161 = math.exp %160 : vector<2x64xf32>
    %cst_35 = arith.constant 1.000000e+00 : f32
    %162 = vector.broadcast %cst_35 : f32 to vector<2x64xf32>
    %163 = arith.addf %162, %161 : vector<2x64xf32>
    %164 = arith.divf %162, %163 : vector<2x64xf32>
    %165 = vector.extract_strided_slice %164 {offsets = [0, 0], sizes = [2, 32], strides = [1, 1]} : vector<2x64xf32> to vector<2x32xf32>
    %166 = vector.extract_strided_slice %164 {offsets = [0, 32], sizes = [2, 32], strides = [1, 1]} : vector<2x64xf32> to vector<2x32xf32>
    %167 = vector.extract_strided_slice %155 {offsets = [0, 64], sizes = [2, 32], strides = [1, 1]} : vector<2x96xf32> to vector<2x32xf32>
    %168 = vector.extract_strided_slice %156 {offsets = [0, 64], sizes = [2, 32], strides = [1, 1]} : vector<2x96xf32> to vector<2x32xf32>
    %169 = arith.addf %168, %15 : vector<2x32xf32>
    %170 = arith.mulf %165, %169 : vector<2x32xf32>
    %171 = arith.addf %167, %170 : vector<2x32xf32>
    %172 = math.tanh %171 : vector<2x32xf32>
    %cst_36 = arith.constant 1.000000e+00 : f32
    %173 = vector.broadcast %cst_36 : f32 to vector<2x32xf32>
    %174 = arith.subf %173, %166 : vector<2x32xf32>
    %175 = arith.mulf %174, %172 : vector<2x32xf32>
    %176 = arith.mulf %166, %154 : vector<2x32xf32>
    %177 = arith.addf %175, %176 : vector<2x32xf32>
    %178 = vector.extract_strided_slice %11 {offsets = [14, 0], sizes = [2, 96], strides = [1, 1]} : vector<16x96xf32> to vector<2x96xf32>
    %cst_37 = arith.constant dense<0.000000e+00> : vector<2x96xf32>
    %179 = tpu.matmul %177, %12, %cst_37 {dimension_numbers = #tpu.dot_dimension_numbers<[1], [0], [0], [1], [0, 0, 1, 1], [], []>} : vector<2x32xf32>, vector<32x96xf32>, vector<2x96xf32> -> vector<2x96xf32>
    %180 = vector.extract_strided_slice %178 {offsets = [0, 0], sizes = [2, 64], strides = [1, 1]} : vector<2x96xf32> to vector<2x64xf32>
    %181 = vector.extract_strided_slice %179 {offsets = [0, 0], sizes = [2, 64], strides = [1, 1]} : vector<2x96xf32> to vector<2x64xf32>
    %182 = arith.addf %180, %181 : vector<2x64xf32>
    %183 = arith.negf %182 : vector<2x64xf32>
    %184 = math.exp %183 : vector<2x64xf32>
    %cst_38 = arith.constant 1.000000e+00 : f32
    %185 = vector.broadcast %cst_38 : f32 to vector<2x64xf32>
    %186 = arith.addf %185, %184 : vector<2x64xf32>
    %187 = arith.divf %185, %186 : vector<2x64xf32>
    %188 = vector.extract_strided_slice %187 {offsets = [0, 0], sizes = [2, 32], strides = [1, 1]} : vector<2x64xf32> to vector<2x32xf32>
    %189 = vector.extract_strided_slice %187 {offsets = [0, 32], sizes = [2, 32], strides = [1, 1]} : vector<2x64xf32> to vector<2x32xf32>
    %190 = vector.extract_strided_slice %178 {offsets = [0, 64], sizes = [2, 32], strides = [1, 1]} : vector<2x96xf32> to vector<2x32xf32>
    %191 = vector.extract_strided_slice %179 {offsets = [0, 64], sizes = [2, 32], strides = [1, 1]} : vector<2x96xf32> to vector<2x32xf32>
    %192 = arith.addf %191, %15 : vector<2x32xf32>
    %193 = arith.mulf %188, %192 : vector<2x32xf32>
    %194 = arith.addf %190, %193 : vector<2x32xf32>
    %195 = math.tanh %194 : vector<2x32xf32>
    %cst_39 = arith.constant 1.000000e+00 : f32
    %196 = vector.broadcast %cst_39 : f32 to vector<2x32xf32>
    %197 = arith.subf %196, %189 : vector<2x32xf32>
    %198 = arith.mulf %197, %195 : vector<2x32xf32>
    %199 = arith.mulf %189, %177 : vector<2x32xf32>
    %200 = arith.addf %198, %199 : vector<2x32xf32>
    %c0_40 = arith.constant 0 : index
    %c0_41 = arith.constant 0 : index
    %201 = vector.load %arg13[%c0_40, %c0_41] : memref<2x32xf32, #tpu.memory_space<vmem>>, vector<2x32xf32>
    tpu.vector_store %arg13[%c0_40, %c0_41], %200 {strides = array<i32>} : memref<2x32xf32, #tpu.memory_space<vmem>>, vector<2x32xf32>,
    %202 = tpu.concatenate %39, %62, %85, %108, %131, %154, %177, %200 in 0 : vector<2x32xf32>, vector<2x32xf32>, vector<2x32xf32>, vector<2x32xf32>, vector<2x32xf32>, vector<2x32xf32>, vector<2x32xf32>, vector<2x32xf32> -> vector<16x32xf32>
    %c0_42 = arith.constant 0 : index
    %c0_43 = arith.constant 0 : index
    %203 = vector.load %arg8[%c0_42, %c0_43] : memref<32x32xf32, #tpu.memory_space<vmem>>, vector<32x32xf32>
    %cst_44 = arith.constant dense<0.000000e+00> : vector<16x32xf32>
    %204 = tpu.matmul %202, %203, %cst_44 {dimension_numbers = #tpu.dot_dimension_numbers<[1], [0], [0], [1], [0, 0, 1, 1], [], []>} : vector<16x32xf32>, vector<32x32xf32>, vector<16x32xf32> -> vector<16x32xf32>
    %c0_45 = arith.constant 0 : index
    %c0_46 = arith.constant 0 : index
    %205 = vector.load %arg9[%c0_45, %c0_46] : memref<1x32xf32, #tpu.memory_space<vmem>>, vector<1x32xf32>
    %206 = vector.broadcast %205 : vector<1x32xf32> to vector<16x32xf32>
    %207 = arith.addf %204, %206 : vector<16x32xf32>
    %208 = math.tanh %207 : vector<16x32xf32>
    %c0_47 = arith.constant 0 : index
    %c0_48 = arith.constant 0 : index
    %209 = vector.load %arg10[%c0_47, %c0_48] : memref<32x4xf32, #tpu.memory_space<vmem>>, vector<32x4xf32>
    %cst_49 = arith.constant dense<0.000000e+00> : vector<16x4xf32>
    %210 = tpu.matmul %208, %209, %cst_49 {dimension_numbers = #tpu.dot_dimension_numbers<[1], [0], [0], [1], [0, 0, 1, 1], [], []>} : vector<16x32xf32>, vector<32x4xf32>, vector<16x4xf32> -> vector<16x4xf32>
    %c0_50 = arith.constant 0 : index
    %c0_51 = arith.constant 0 : index
    %211 = vector.load %arg11[%c0_50, %c0_51] : memref<1x4xf32, #tpu.memory_space<vmem>>, vector<1x4xf32>
    %212 = vector.broadcast %211 : vector<1x4xf32> to vector<16x4xf32>
    %213 = arith.addf %210, %212 : vector<16x4xf32>
    %214 = math.tanh %213 : vector<16x4xf32>
    %c0_52 = arith.constant 0 : index
    %c0_53 = arith.constant 0 : index
    %215 = vector.load %arg12[%c0_52, %c0_53] : memref<16x4xf32, #tpu.memory_space<vmem>>, vector<16x4xf32>
    tpu.vector_store %arg12[%c0_52, %c0_53], %214 {strides = array<i32>} : memref<16x4xf32, #tpu.memory_space<vmem>>, vector<16x4xf32>,
    return
  }
}

</mosaic_0001>

<llo_original>
// kernel: gaussian_actor_forward.1
$region0: #{gaussian_actor_forward.1}
  #allocation0 [shape = 'u32[]', space=smem, size = 0x4, offset = 0x4, fixed_abs, tag = 'smem constant byte address 0x4 - core index']
  #allocation1 [shape = 'u32[144,128]{1,0:T(1,128)}', space=vmem, size = 0x12000, scoped, tag = 'internal scratch']
  %s0 = inlined_call_operand.vmem [shape: f32[16,24], index: 0, kind: input, shape index: {}]
  %s1 = inlined_call_operand.vmem [shape: f32[2,32], index: 1, kind: input, shape index: {}]
  %s2 = inlined_call_operand.vmem [shape: f32[24,32], index: 2, kind: input, shape index: {}]
  %s3 = inlined_call_operand.vmem [shape: f32[1,32], index: 3, kind: input, shape index: {}]
  %s4 = inlined_call_operand.vmem [shape: f32[32,96], index: 4, kind: input, shape index: {}]
  %s5 = inlined_call_operand.vmem [shape: f32[32,96], index: 5, kind: input, shape index: {}]
  %s6 = inlined_call_operand.vmem [shape: f32[1,96], index: 6, kind: input, shape index: {}]
  %s7 = inlined_call_operand.vmem [shape: f32[1,32], index: 7, kind: input, shape index: {}]
  %s8 = inlined_call_operand.vmem [shape: f32[32,32], index: 8, kind: input, shape index: {}]
  %s9 = inlined_call_operand.vmem [shape: f32[1,32], index: 9, kind: input, shape index: {}]
  %s10 = inlined_call_operand.vmem [shape: f32[32,4], index: 10, kind: input, shape index: {}]
  %s11 = inlined_call_operand.vmem [shape: f32[1,4], index: 11, kind: input, shape index: {}]
  %s12 = inlined_call_operand.vmem [shape: f32[16,4], index: 12, kind: output, shape index: {0}]
  %s13 = inlined_call_operand.hbm [shape: f32[2,32], index: 13, kind: output, shape index: {1}]
  %14 = xla_tuple %s12, %s13
  %s15 = sld [smem:[#allocation0]]
  $region66: #{gaussian_actor_forward.1} parent=0
    _
  %s17 = ssub.s32 1, %s15
  %s18 = scalar_select 0, %s17, %s15
  $region1: #{gaussian_actor_forward.1} parent=0
    #allocation2 [shape = 'u8[1024]{0}', space=vmem, size = 0x400, scoped, tag = 'output window, operand 1, single buffered']
    #allocation3 [shape = 's32[1]{0}', space=sflag, size = 0x4, scoped, tag = 'scoped memory for gaussian_actor_forward.1']
    %19 = vsyncpa [#allocation3], 0
    // Predicated region
    $region2: #{gaussian_actor_forward.1} parent=1 // pred_check
      _
    $region3: #{gaussian_actor_forward.1} parent=1 // pred_check_branch
      %21 = sbr.rel (0) target = $region5
    $region4: #{gaussian_actor_forward.1} parent=1 // pred_region
      _
    $region5: #{gaussian_actor_forward.1} parent=1 // pred_fallthru
      _
    // Predicated region
    $region6: #{gaussian_actor_forward.1} parent=1 // pred_check
      _
    $region7: #{gaussian_actor_forward.1} parent=1 // pred_check_branch
      %23 = sbr.rel (0) target = $region9
    $region8: #{gaussian_actor_forward.1} parent=1 // pred_region
      _
    $region9: #{gaussian_actor_forward.1} parent=1 // pred_fallthru
      _
    // Predicated region
    $region10: #{gaussian_actor_forward.1} parent=1 // pred_check
      _
    $region11: #{gaussian_actor_forward.1} parent=1 // pred_check_branch
      %25 = sbr.rel (0) target = $region13
    $region12: #{gaussian_actor_forward.1} parent=1 // pred_region
      _
    $region13: #{gaussian_actor_forward.1} parent=1 // pred_fallthru
      _
    // Predicated region
    $region14: #{gaussian_actor_forward.1} parent=1 // pred_check
      _
    $region15: #{gaussian_actor_forward.1} parent=1 // pred_check_branch
      %27 = sbr.rel (0) target = $region17
    $region16: #{gaussian_actor_forward.1} parent=1 // pred_region
      _
    $region17: #{gaussian_actor_forward.1} parent=1 // pred_fallthru
      _
    // Predicated region
    $region18: #{gaussian_actor_forward.1} parent=1 // pred_check
      _
    $region19: #{gaussian_actor_forward.1} parent=1 // pred_check_branch
      %29 = sbr.rel (0) target = $region21
    $region20: #{gaussian_actor_forward.1} parent=1 // pred_region
      _
    $region21: #{gaussian_actor_forward.1} parent=1 // pred_fallthru
      _
    // Predicated region
    $region22: #{gaussian_actor_forward.1} parent=1 // pred_check
      _
    $region23: #{gaussian_actor_forward.1} parent=1 // pred_check_branch
      %31 = sbr.rel (0) target = $region25
    $region24: #{gaussian_actor_forward.1} parent=1 // pred_region
      _
    $region25: #{gaussian_actor_forward.1} parent=1 // pred_fallthru
      _
    // Predicated region
    $region26: #{gaussian_actor_forward.1} parent=1 // pred_check
      _
    $region27: #{gaussian_actor_forward.1} parent=1 // pred_check_branch
      %33 = sbr.rel (0) target = $region29
    $region28: #{gaussian_actor_forward.1} parent=1 // pred_region
      _
    $region29: #{gaussian_actor_forward.1} parent=1 // pred_fallthru
      _
    // Predicated region
    $region30: #{gaussian_actor_forward.1} parent=1 // pred_check
      _
    $region31: #{gaussian_actor_forward.1} parent=1 // pred_check_branch
      %35 = sbr.rel (0) target = $region33
    $region32: #{gaussian_actor_forward.1} parent=1 // pred_region
      _
    $region33: #{gaussian_actor_forward.1} parent=1 // pred_fallthru
      _
    // Predicated region
    $region34: #{gaussian_actor_forward.1} parent=1 // pred_check
      _
    $region35: #{gaussian_actor_forward.1} parent=1 // pred_check_branch
      %37 = sbr.rel (0) target = $region37
    $region36: #{gaussian_actor_forward.1} parent=1 // pred_region
      _
    $region37: #{gaussian_actor_forward.1} parent=1 // pred_fallthru
      _
    // Predicated region
    $region38: #{gaussian_actor_forward.1} parent=1 // pred_check
      _
    $region39: #{gaussian_actor_forward.1} parent=1 // pred_check_branch
      %39 = sbr.rel (0) target = $region41
    $region40: #{gaussian_actor_forward.1} parent=1 // pred_region
      _
    $region41: #{gaussian_actor_forward.1} parent=1 // pred_fallthru
      _
    // Predicated region
    $region42: #{gaussian_actor_forward.1} parent=1 // pred_check
      _
    $region43: #{gaussian_actor_forward.1} parent=1 // pred_check_branch
      %41 = sbr.rel (0) target = $region45
    $region44: #{gaussian_actor_forward.1} parent=1 // pred_region
      _
    $region45: #{gaussian_actor_forward.1} parent=1 // pred_fallthru
      _
    // Predicated region
    $region46: #{gaussian_actor_forward.1} parent=1 // pred_check
      _
    $region47: #{gaussian_actor_forward.1} parent=1 // pred_check_branch
      %43 = sbr.rel (0) target = $region49
    $region48: #{gaussian_actor_forward.1} parent=1 // pred_region
      _
    $region49: #{gaussian_actor_forward.1} parent=1 // pred_fallthru
      _
    %v44 = vld [vmem:[%s0] sm:$0xff]
    %v45 = vld [vmem:[%s0 + $0x8] sm:$0xff]
    %v46 = vld [vmem:[%s2] sm:$0xff]
    %v47 = vld [vmem:[%s2 + $0x8] sm:$0xff]
    %v48 = vld [vmem:[%s2 + $0x10] sm:$0xff]
    %v49 = vld [vmem:[%s3] sm:$0x1]
    %v51 = vlaneseq
    %v52 = vshrl.u32 %v51, 7
    %v53 = vsub.s32 0, %v52
    %v54 = vrot.slane %v49, %v53
    %vm56 = vcmask 195584
    %v58 = vsel %vm56, %v44, 0
    %v61 = vsel %vm56, %v45, 0
    %63 = vmatprep.subr.mxu0 0.0
    %64 = vmatpush1.msra.mxu0 %v46
    %65 = vmatprep.subr.mxu0 0.0
    %66 = vmatpush1.msra.mxu0 %v47
    %67 = vmatprep.subr.mxu0 0.0
    %68 = vmatpush1.msra.mxu0 %v48
    %69 = vmatprep.subr.mxu0 0.0
    %70 = vmatpush1.msra.mxu0 0.0
    %71 = vmatprep.subr.mxu0 0.0
    %72 = vmatpush1.msra.mxu0 0.0
    %73 = vmatprep.subr.mxu0 0.0
    %74 = vmatpush1.msra.mxu0 0.0
    %75 = vmatprep.subr.mxu0 0.0
    %76 = vmatpush1.msra.mxu0 0.0
    %77 = vmatprep.subr.mxu0 0.0
    %78 = vmatpush1.msra.mxu0 0.0
    %79 = vmatprep.subr.mxu0 0.0
    %80 = vmatpush1.msra.mxu0 0.0
    %81 = vmatprep.subr.mxu0 0.0
    %82 = vmatpush1.msra.mxu0 0.0
    %83 = vmatprep.subr.mxu0 0.0
    %84 = vmatpush1.msra.mxu0 0.0
    %85 = vmatprep.subr.mxu0 0.0
    %86 = vmatpush1.msra.mxu0 0.0
    %87 = vmatprep.subr.mxu0 0.0
    %88 = vmatpush1.msra.mxu0 0.0
    %89 = vmatprep.subr.mxu0 0.0
    %90 = vmatpush1.msra.mxu0 0.0
    %91 = vmatprep.subr.mxu0 0.0
    %92 = vmatpush1.msra.mxu0 0.0
    %93 = vmatprep.subr.mxu0 0.0
    %94 = vmatpush1.msra.mxu0 0.0
    %95 = vmatprep.subr.mxu0 0.0
    %96 = vmatpush1.msra.mxu0 0.0
    %97 = vmatprep.subr.mxu0 0.0
    %98 = vmatpush1.msra.mxu0 0.0
    %99 = vmatprep.subr.mxu0 0.0
    %100 = vmatpush1.msra.mxu0 0.0
    %101 = vmatprep.subr.mxu0 0.0
    %102 = vmatpush1.msra.mxu0 0.0
    %103 = vmatprep.subr.mxu0 0.0
    %104 = vmatpush1.msra.mxu0 0.0
    %105 = vmatprep.subr.mxu0 0.0
    %106 = vmatpush1.msra.mxu0 0.0
    %107 = vmatprep.subr.mxu0 0.0
    %108 = vmatpush1.msra.mxu0 0.0
    %109 = vmatprep.subr.mxu0 0.0
    %110 = vmatpush1.msra.mxu0 0.0
    %111 = vmatprep.subr.mxu0 0.0
    %112 = vmatpush1.msra.mxu0 0.0
    %113 = vmatprep.subr.mxu0 0.0
    %114 = vmatpush1.msra.mxu0 0.0
    %115 = vmatprep.subr.mxu0 0.0
    %116 = vmatpush1.msra.mxu0 0.0
    %117 = vmatprep.subr.mxu0 0.0
    %118 = vmatpush1.msra.mxu0 0.0
    %119 = vmatprep.subr.mxu0 0.0
    %120 = vmatpush1.msra.mxu0 0.0
    %121 = vmatprep.subr.mxu0 0.0
    %122 = vmatpush1.msra.mxu0 0.0
    %123 = vmatprep.subr.mxu0 0.0
    %124 = vmatpush1.msra.mxu0 0.0
    %125 = vmatprep.subr.mxu0 0.0
    %126 = vmatpush1.msra.mxu0 0.0
    %127 = vmatprep.mubr.f32.mxu0 0.0
    %128 = vmatmul.mubr.f32.gmra.mrb[0].mxu0 %v58
    %v129 = vpop.f32.mrb[0].mxu0
    %v130 = vadd.f32 %v54, %v129
    %v131 = vpop.f32.mrb[0].mxu0
    %132 = vmatprep.mubr.f32.mxu0 0.0
    %133 = vmatmul.mubr.f32.gmra.mrb[0].mxu0 %v61
    %v134 = vpop.f32.mrb[0].mxu0
    %v135 = vadd.f32 %v54, %v134
    %v136 = vpop.f32.mrb[0].mxu0
    %137 = vdwg.mxu0
    %v138 = vtanh.pop %v130
    %v139 = vtanh.pop %v135
    %v140 = vld [vmem:[%s4] sm:$0xff]
    %v141 = vld [vmem:[%s4 + $0x8] sm:$0xff]
    %v142 = vld [vmem:[%s4 + $0x10] sm:$0xff]
    %v143 = vld [vmem:[%s4 + $0x18] sm:$0xff]
    %v144 = vld [vmem:[%s6] sm:$0x1]
    %v146 = vlaneseq
    %v147 = vshrl.u32 %v146, 7
    %v148 = vsub.s32 0, %v147
    %v149 = vrot.slane %v144, %v148
    %vm151 = vcmask 261120
    %v153 = vsel %vm151, %v138, 0
    %v156 = vsel %vm151, %v139, 0
    %158 = vmatprep.subr.mxu0 0.0
    %159 = vmatpush1.msra.mxu0 %v140
    %160 = vmatprep.subr.mxu0 0.0
    %161 = vmatpush1.msra.mxu0 %v141
    %162 = vmatprep.subr.mxu0 0.0
    %163 = vmatpush1.msra.mxu0 %v142
    %164 = vmatprep.subr.mxu0 0.0
    %165 = vmatpush1.msra.mxu0 %v143
    %166 = vmatprep.subr.mxu0 0.0
    %167 = vmatpush1.msra.mxu0 0.0
    %168 = vmatprep.subr.mxu0 0.0
    %169 = vmatpush1.msra.mxu0 0.0
    %170 = vmatprep.subr.mxu0 0.0
    %171 = vmatpush1.msra.mxu0 0.0
    %172 = vmatprep.subr.mxu0 0.0
    %173 = vmatpush1.msra.mxu0 0.0
    %174 = vmatprep.subr.mxu0 0.0
    %175 = vmatpush1.msra.mxu0 0.0
    %176 = vmatprep.subr.mxu0 0.0
    %177 = vmatpush1.msra.mxu0 0.0
    %178 = vmatprep.subr.mxu0 0.0
    %179 = vmatpush1.msra.mxu0 0.0
    %180 = vmatprep.subr.mxu0 0.0
    %181 = vmatpush1.msra.mxu0 0.0
    %182 = vmatprep.subr.mxu0 0.0
    %183 = vmatpush1.msra.mxu0 0.0
    %184 = vmatprep.subr.mxu0 0.0
    %185 = vmatpush1.msra.mxu0 0.0
    %186 = vmatprep.subr.mxu0 0.0
    %187 = vmatpush1.msra.mxu0 0.0
    %188 = vmatprep.subr.mxu0 0.0
    %189 = vmatpush1.msra.mxu0 0.0
    %190 = vmatprep.subr.mxu0 0.0
    %191 = vmatpush1.msra.mxu0 0.0
    %192 = vmatprep.subr.mxu0 0.0
    %193 = vmatpush1.msra.mxu0 0.0
    %194 = vmatprep.subr.mxu0 0.0
    %195 = vmatpush1.msra.mxu0 0.0
    %196 = vmatprep.subr.mxu0 0.0
    %197 = vmatpush1.msra.mxu0 0.0
    %198 = vmatprep.subr.mxu0 0.0
    %199 = vmatpush1.msra.mxu0 0.0
    %200 = vmatprep.subr.mxu0 0.0
    %201 = vmatpush1.msra.mxu0 0.0
    %202 = vmatprep.subr.mxu0 0.0
    %203 = vmatpush1.msra.mxu0 0.0
    %204 = vmatprep.subr.mxu0 0.0
    %205 = vmatpush1.msra.mxu0 0.0
    %206 = vmatprep.subr.mxu0 0.0
    %207 = vmatpush1.msra.mxu0 0.0
    %208 = vmatprep.subr.mxu0 0.0
    %209 = vmatpush1.msra.mxu0 0.0
    %210 = vmatprep.subr.mxu0 0.0
    %211 = vmatpush1.msra.mxu0 0.0
    %212 = vmatprep.subr.mxu0 0.0
    %213 = vmatpush1.msra.mxu0 0.0
    %214 = vmatprep.subr.mxu0 0.0
    %215 = vmatpush1.msra.mxu0 0.0
    %216 = vmatprep.subr.mxu0 0.0
    %217 = vmatpush1.msra.mxu0 0.0
    %218 = vmatprep.subr.mxu0 0.0
    %219 = vmatpush1.msra.mxu0 0.0
    %220 = vmatprep.subr.mxu0 0.0
    %221 = vmatpush1.msra.mxu0 0.0
    %222 = vmatprep.mubr.f32.mxu0 0.0
    %223 = vmatmul.mubr.f32.gmra.mrb[0].mxu0 %v153
    %v224 = vpop.f32.mrb[0].mxu0
    %v225 = vadd.f32 %v149, %v224
    %v226 = vpop.f32.mrb[0].mxu0
    %227 = vmatprep.mubr.f32.mxu0 0.0
    %228 = vmatmul.mubr.f32.gmra.mrb[0].mxu0 %v156
    %v229 = vpop.f32.mrb[0].mxu0
    %v230 = vadd.f32 %v149, %v229
    %v231 = vpop.f32.mrb[0].mxu0
    %232 = vdwg.mxu0
    %v233 = vld [vmem:[%s5] sm:$0xff]
    %v234 = vld [vmem:[%s5 + $0x8] sm:$0xff]
    %v235 = vld [vmem:[%s5 + $0x10] sm:$0xff]
    %v236 = vld [vmem:[%s5 + $0x18] sm:$0xff]
    %v237 = vld [vmem:[%s7] sm:$0x1]
    %v239 = vlaneseq
    %v240 = vshrl.u32 %v239, 7
    %v241 = vsub.s32 0, %v240
    %v242 = vrot.slane %v237, %v241
    %v243 = vld [vmem:[%s1] sm:$0x3]
    %v245 = vsel %vm151, %v243, 0
    %247 = vmatprep.subr.mxu0 0.0
    %248 = vmatpush1.msra.mxu0 %v233
    %249 = vmatprep.subr.mxu0 0.0
    %250 = vmatpush1.msra.mxu0 %v234
    %251 = vmatprep.subr.mxu0 0.0
    %252 = vmatpush1.msra.mxu0 %v235
    %253 = vmatprep.subr.mxu0 0.0
    %254 = vmatpush1.msra.mxu0 %v236
    %255 = vmatprep.subr.mxu0 0.0
    %256 = vmatpush1.msra.mxu0 0.0
    %257 = vmatprep.subr.mxu0 0.0
    %258 = vmatpush1.msra.mxu0 0.0
    %259 = vmatprep.subr.mxu0 0.0
    %260 = vmatpush1.msra.mxu0 0.0
    %261 = vmatprep.subr.mxu0 0.0
    %262 = vmatpush1.msra.mxu0 0.0
    %263 = vmatprep.subr.mxu0 0.0
    %264 = vmatpush1.msra.mxu0 0.0
    %265 = vmatprep.subr.mxu0 0.0
    %266 = vmatpush1.msra.mxu0 0.0
    %267 = vmatprep.subr.mxu0 0.0
    %268 = vmatpush1.msra.mxu0 0.0
    %269 = vmatprep.subr.mxu0 0.0
    %270 = vmatpush1.msra.mxu0 0.0
    %271 = vmatprep.subr.mxu0 0.0
    %272 = vmatpush1.msra.mxu0 0.0
    %273 = vmatprep.subr.mxu0 0.0
    %274 = vmatpush1.msra.mxu0 0.0
    %275 = vmatprep.subr.mxu0 0.0
    %276 = vmatpush1.msra.mxu0 0.0
    %277 = vmatprep.subr.mxu0 0.0
    %278 = vmatpush1.msra.mxu0 0.0
    %279 = vmatprep.subr.mxu0 0.0
    %280 = vmatpush1.msra.mxu0 0.0
    %281 = vmatprep.subr.mxu0 0.0
    %282 = vmatpush1.msra.mxu0 0.0
    %283 = vmatprep.subr.mxu0 0.0
    %284 = vmatpush1.msra.mxu0 0.0
    %285 = vmatprep.subr.mxu0 0.0
    %286 = vmatpush1.msra.mxu0 0.0
    %287 = vmatprep.subr.mxu0 0.0
    %288 = vmatpush1.msra.mxu0 0.0
    %289 = vmatprep.subr.mxu0 0.0
    %290 = vmatpush1.msra.mxu0 0.0
    %291 = vmatprep.subr.mxu0 0.0
    %292 = vmatpush1.msra.mxu0 0.0
    %293 = vmatprep.subr.mxu0 0.0
    %294 = vmatpush1.msra.mxu0 0.0
    %295 = vmatprep.subr.mxu0 0.0
    %296 = vmatpush1.msra.mxu0 0.0
    %297 = vmatprep.subr.mxu0 0.0
    %298 = vmatpush1.msra.mxu0 0.0
    %299 = vmatprep.subr.mxu0 0.0
    %300 = vmatpush1.msra.mxu0 0.0
    %301 = vmatprep.subr.mxu0 0.0
    %302 = vmatpush1.msra.mxu0 0.0
    %303 = vmatprep.subr.mxu0 0.0
    %304 = vmatpush1.msra.mxu0 0.0
    %305 = vmatprep.subr.mxu0 0.0
    %306 = vmatpush1.msra.mxu0 0.0
    %307 = vmatprep.subr.mxu0 0.0
    %308 = vmatpush1.msra.mxu0 0.0
    %309 = vmatprep.subr.mxu0 0.0
    %310 = vmatpush1.msra.mxu0 0.0
    %311 = vmatprep.mubr.f32.mxu0 0.0
    %312 = vmatmul.mubr.f32.gmra.mrb[0].mxu0 %v245
    %v313 = vpop.f32.mrb[0].mxu0
    %v314 = vadd.f32 0.0, %v313
    %v315 = vpop.f32.mrb[0].mxu0
    %316 = vdwg.mxu0
    %v317 = vadd.f32 %v225, %v314
    %v318 = vxor.u32 %v317, 2147483648
    %v319 = vmul.f32 %v318, 1.442695
    %v320 = vpow.pop %v319
    %v321 = vadd.f32 %v320, 1.0
    %v322 = vrcp.pop %v321
    %v323 = vmul.f32 1.0, %v322
    %324 = vrot.lane.b32.xlu0 %v242, 64
    %v325 = vpop.permute.xlu0 %324
    %v327 = vadd.f32 %v314, %v325
    %329 = vrot.lane.b32.xlu0 %v327, 64
    %v330 = vpop.permute.xlu0 %329
    %v332 = vmul.f32 %v323, %v330
    %334 = vrot.lane.b32.xlu0 %v332, 64
    %v335 = vpop.permute.xlu0 %334
    %v337 = vadd.f32 %v225, %v335
    %v338 = vtanh.pop %v337
    %v339 = vsub.f32 1.0, %v323
    %341 = vrot.lane.b32.xlu0 %v338, 96
    %v342 = vpop.permute.xlu0 %341
    %v344 = vmul.f32 %v339, %v342
    %345 = vrot.lane.b32.xlu0 %v243, 32
    %v346 = vpop.permute.xlu0 %345
    %v348 = vmul.f32 %v323, %v346
    %v349 = vadd.f32 %v344, %v348
    %351 = vrot.lane.b32.xlu0 %v349, 96
    %v352 = vpop.permute.xlu0 %351
    %v353 = vsel %vm151, %v352, 0
    %355 = vmatprep.subr.mxu0 0.0
    %356 = vmatpush1.msra.mxu0 %v233
    %357 = vmatprep.subr.mxu0 0.0
    %358 = vmatpush1.msra.mxu0 %v234
    %359 = vmatprep.subr.mxu0 0.0
    %360 = vmatpush1.msra.mxu0 %v235
    %361 = vmatprep.subr.mxu0 0.0
    %362 = vmatpush1.msra.mxu0 %v236
    %363 = vmatprep.subr.mxu0 0.0
    %364 = vmatpush1.msra.mxu0 0.0
    %365 = vmatprep.subr.mxu0 0.0
    %366 = vmatpush1.msra.mxu0 0.0
    %367 = vmatprep.subr.mxu0 0.0
    %368 = vmatpush1.msra.mxu0 0.0
    %369 = vmatprep.subr.mxu0 0.0
    %370 = vmatpush1.msra.mxu0 0.0
    %371 = vmatprep.subr.mxu0 0.0
    %372 = vmatpush1.msra.mxu0 0.0
    %373 = vmatprep.subr.mxu0 0.0
    %374 = vmatpush1.msra.mxu0 0.0
    %375 = vmatprep.subr.mxu0 0.0
    %376 = vmatpush1.msra.mxu0 0.0
    %377 = vmatprep.subr.mxu0 0.0
    %378 = vmatpush1.msra.mxu0 0.0
    %379 = vmatprep.subr.mxu0 0.0
    %380 = vmatpush1.msra.mxu0 0.0
    %381 = vmatprep.subr.mxu0 0.0
    %382 = vmatpush1.msra.mxu0 0.0
    %383 = vmatprep.subr.mxu0 0.0
    %384 = vmatpush1.msra.mxu0 0.0
    %385 = vmatprep.subr.mxu0 0.0
    %386 = vmatpush1.msra.mxu0 0.0
    %387 = vmatprep.subr.mxu0 0.0
    %388 = vmatpush1.msra.mxu0 0.0
    %389 = vmatprep.subr.mxu0 0.0
    %390 = vmatpush1.msra.mxu0 0.0
    %391 = vmatprep.subr.mxu0 0.0
    %392 = vmatpush1.msra.mxu0 0.0
    %393 = vmatprep.subr.mxu0 0.0
    %394 = vmatpush1.msra.mxu0 0.0
    %395 = vmatprep.subr.mxu0 0.0
    %396 = vmatpush1.msra.mxu0 0.0
    %397 = vmatprep.subr.mxu0 0.0
    %398 = vmatpush1.msra.mxu0 0.0
    %399 = vmatprep.subr.mxu0 0.0
    %400 = vmatpush1.msra.mxu0 0.0
    %401 = vmatprep.subr.mxu0 0.0
    %402 = vmatpush1.msra.mxu0 0.0
    %403 = vmatprep.subr.mxu0 0.0
    %404 = vmatpush1.msra.mxu0 0.0
    %405 = vmatprep.subr.mxu0 0.0
    %406 = vmatpush1.msra.mxu0 0.0
    %407 = vmatprep.subr.mxu0 0.0
    %408 = vmatpush1.msra.mxu0 0.0
    %409 = vmatprep.subr.mxu0 0.0
    %410 = vmatpush1.msra.mxu0 0.0
    %411 = vmatprep.subr.mxu0 0.0
    %412 = vmatpush1.msra.mxu0 0.0
    %413 = vmatprep.subr.mxu0 0.0
    %414 = vmatpush1.msra.mxu0 0.0
    %415 = vmatprep.subr.mxu0 0.0
    %416 = vmatpush1.msra.mxu0 0.0
    %417 = vmatprep.subr.mxu0 0.0
    %418 = vmatpush1.msra.mxu0 0.0
    %419 = vmatprep.mubr.f32.mxu0 0.0
    %420 = vmatmul.mubr.f32.gmra.mrb[0].mxu0 %v353
    %v421 = vpop.f32.mrb[0].mxu0
    %v422 = vadd.f32 0.0, %v421
    %v423 = vpop.f32.mrb[0].mxu0
    %424 = vdwg.mxu0
    %v426 = vrot.slane %v422, 6
    %v428 = vadd.f32 %v225, %v426
    %v429 = vxor.u32 %v428, 2147483648
    %v430 = vmul.f32 %v429, 1.442695
    %v431 = vpow.pop %v430
    %v432 = vadd.f32 %v431, 1.0
    %v433 = vrcp.pop %v432
    %v434 = vmul.f32 1.0, %v433
    %v435 = vadd.f32 %v422, %v325
    %v437 = vrot.slane %v435, 6
    %438 = vrot.lane.b32.xlu0 %v437, 64
    %v439 = vpop.permute.xlu0 %438
    %v441 = vmul.f32 %v434, %v439
    %443 = vrot.lane.b32.xlu0 %v441, 64
    %v444 = vpop.permute.xlu0 %443
    %v446 = vadd.f32 %v225, %v444
    %v447 = vtanh.pop %v446
    %v448 = vsub.f32 1.0, %v434
    %450 = vrot.lane.b32.xlu0 %v447, 96
    %v451 = vpop.permute.xlu0 %450
    %v453 = vmul.f32 %v448, %v451
    %v454 = vrot.slane %v349, 6
    %v456 = vmul.f32 %v434, %v454
    %v457 = vadd.f32 %v453, %v456
    %v459 = vrot.slane %v457, 2
    %460 = vrot.lane.b32.xlu0 %v459, 96
    %v461 = vpop.permute.xlu0 %460
    %v462 = vsel %vm151, %v461, 0
    %464 = vmatprep.subr.mxu0 0.0
    %465 = vmatpush1.msra.mxu0 %v233
    %466 = vmatprep.subr.mxu0 0.0
    %467 = vmatpush1.msra.mxu0 %v234
    %468 = vmatprep.subr.mxu0 0.0
    %469 = vmatpush1.msra.mxu0 %v235
    %470 = vmatprep.subr.mxu0 0.0
    %471 = vmatpush1.msra.mxu0 %v236
    %472 = vmatprep.subr.mxu0 0.0
    %473 = vmatpush1.msra.mxu0 0.0
    %474 = vmatprep.subr.mxu0 0.0
    %475 = vmatpush1.msra.mxu0 0.0
    %476 = vmatprep.subr.mxu0 0.0
    %477 = vmatpush1.msra.mxu0 0.0
    %478 = vmatprep.subr.mxu0 0.0
    %479 = vmatpush1.msra.mxu0 0.0
    %480 = vmatprep.subr.mxu0 0.0
    %481 = vmatpush1.msra.mxu0 0.0
    %482 = vmatprep.subr.mxu0 0.0
    %483 = vmatpush1.msra.mxu0 0.0
    %484 = vmatprep.subr.mxu0 0.0
    %485 = vmatpush1.msra.mxu0 0.0
    %486 = vmatprep.subr.mxu0 0.0
    %487 = vmatpush1.msra.mxu0 0.0
    %488 = vmatprep.subr.mxu0 0.0
    %489 = vmatpush1.msra.mxu0 0.0
    %490 = vmatprep.subr.mxu0 0.0
    %491 = vmatpush1.msra.mxu0 0.0
    %492 = vmatprep.subr.mxu0 0.0
    %493 = vmatpush1.msra.mxu0 0.0
    %494 = vmatprep.subr.mxu0 0.0
    %495 = vmatpush1.msra.mxu0 0.0
    %496 = vmatprep.subr.mxu0 0.0
    %497 = vmatpush1.msra.mxu0 0.0
    %498 = vmatprep.subr.mxu0 0.0
    %499 = vmatpush1.msra.mxu0 0.0
    %500 = vmatprep.subr.mxu0 0.0
    %501 = vmatpush1.msra.mxu0 0.0
    %502 = vmatprep.subr.mxu0 0.0
    %503 = vmatpush1.msra.mxu0 0.0
    %504 = vmatprep.subr.mxu0 0.0
    %505 = vmatpush1.msra.mxu0 0.0
    %506 = vmatprep.subr.mxu0 0.0
    %507 = vmatpush1.msra.mxu0 0.0
    %508 = vmatprep.subr.mxu0 0.0
    %509 = vmatpush1.msra.mxu0 0.0
    %510 = vmatprep.subr.mxu0 0.0
    %511 = vmatpush1.msra.mxu0 0.0
    %512 = vmatprep.subr.mxu0 0.0
    %513 = vmatpush1.msra.mxu0 0.0
    %514 = vmatprep.subr.mxu0 0.0
    %515 = vmatpush1.msra.mxu0 0.0
    %516 = vmatprep.subr.mxu0 0.0
    %517 = vmatpush1.msra.mxu0 0.0
    %518 = vmatprep.subr.mxu0 0.0
    %519 = vmatpush1.msra.mxu0 0.0
    %520 = vmatprep.subr.mxu0 0.0
    %521 = vmatpush1.msra.mxu0 0.0
    %522 = vmatprep.subr.mxu0 0.0
    %523 = vmatpush1.msra.mxu0 0.0
    %524 = vmatprep.subr.mxu0 0.0
    %525 = vmatpush1.msra.mxu0 0.0
    %526 = vmatprep.subr.mxu0 0.0
    %527 = vmatpush1.msra.mxu0 0.0
    %528 = vmatprep.mubr.f32.mxu0 0.0
    %529 = vmatmul.mubr.f32.gmra.mrb[0].mxu0 %v462
    %v530 = vpop.f32.mrb[0].mxu0
    %v531 = vadd.f32 0.0, %v530
    %v532 = vpop.f32.mrb[0].mxu0
    %533 = vdwg.mxu0
    %v535 = vrot.slane %v531, 4
    %v537 = vadd.f32 %v225, %v535
    %v538 = vxor.u32 %v537, 2147483648
    %v539 = vmul.f32 %v538, 1.442695
    %v540 = vpow.pop %v539
    %v541 = vadd.f32 %v540, 1.0
    %v542 = vrcp.pop %v541
    %v543 = vmul.f32 1.0, %v542
    %v544 = vadd.f32 %v531, %v325
    %v546 = vrot.slane %v544, 4
    %547 = vrot.lane.b32.xlu0 %v546, 64
    %v548 = vpop.permute.xlu0 %547
    %v550 = vmul.f32 %v543, %v548
    %552 = vrot.lane.b32.xlu0 %v550, 64
    %v553 = vpop.permute.xlu0 %552
    %v555 = vadd.f32 %v225, %v553
    %v556 = vtanh.pop %v555
    %v557 = vsub.f32 1.0, %v543
    %559 = vrot.lane.b32.xlu0 %v556, 96
    %v560 = vpop.permute.xlu0 %559
    %v562 = vmul.f32 %v557, %v560
    %v563 = vrot.slane %v457, 6
    %v565 = vmul.f32 %v543, %v563
    %v566 = vadd.f32 %v562, %v565
    %v568 = vrot.slane %v566, 4
    %569 = vrot.lane.b32.xlu0 %v568, 96
    %v570 = vpop.permute.xlu0 %569
    %v571 = vsel %vm151, %v570, 0
    %573 = vmatprep.subr.mxu0 0.0
    %574 = vmatpush1.msra.mxu0 %v233
    %575 = vmatprep.subr.mxu0 0.0
    %576 = vmatpush1.msra.mxu0 %v234
    %577 = vmatprep.subr.mxu0 0.0
    %578 = vmatpush1.msra.mxu0 %v235
    %579 = vmatprep.subr.mxu0 0.0
    %580 = vmatpush1.msra.mxu0 %v236
    %581 = vmatprep.subr.mxu0 0.0
    %582 = vmatpush1.msra.mxu0 0.0
    %583 = vmatprep.subr.mxu0 0.0
    %584 = vmatpush1.msra.mxu0 0.0
    %585 = vmatprep.subr.mxu0 0.0
    %586 = vmatpush1.msra.mxu0 0.0
    %587 = vmatprep.subr.mxu0 0.0
    %588 = vmatpush1.msra.mxu0 0.0
    %589 = vmatprep.subr.mxu0 0.0
    %590 = vmatpush1.msra.mxu0 0.0
    %591 = vmatprep.subr.mxu0 0.0
    %592 = vmatpush1.msra.mxu0 0.0
    %593 = vmatprep.subr.mxu0 0.0
    %594 = vmatpush1.msra.mxu0 0.0
    %595 = vmatprep.subr.mxu0 0.0
    %596 = vmatpush1.msra.mxu0 0.0
    %597 = vmatprep.subr.mxu0 0.0
    %598 = vmatpush1.msra.mxu0 0.0
    %599 = vmatprep.subr.mxu0 0.0
    %600 = vmatpush1.msra.mxu0 0.0
    %601 = vmatprep.subr.mxu0 0.0
    %602 = vmatpush1.msra.mxu0 0.0
    %603 = vmatprep.subr.mxu0 0.0
    %604 = vmatpush1.msra.mxu0 0.0
    %605 = vmatprep.subr.mxu0 0.0
    %606 = vmatpush1.msra.mxu0 0.0
    %607 = vmatprep.subr.mxu0 0.0
    %608 = vmatpush1.msra.mxu0 0.0
    %609 = vmatprep.subr.mxu0 0.0
    %610 = vmatpush1.msra.mxu0 0.0
    %611 = vmatprep.subr.mxu0 0.0
    %612 = vmatpush1.msra.mxu0 0.0
    %613 = vmatprep.subr.mxu0 0.0
    %614 = vmatpush1.msra.mxu0 0.0
    %615 = vmatprep.subr.mxu0 0.0
    %616 = vmatpush1.msra.mxu0 0.0
    %617 = vmatprep.subr.mxu0 0.0
    %618 = vmatpush1.msra.mxu0 0.0
    %619 = vmatprep.subr.mxu0 0.0
    %620 = vmatpush1.msra.mxu0 0.0
    %621 = vmatprep.subr.mxu0 0.0
    %622 = vmatpush1.msra.mxu0 0.0
    %623 = vmatprep.subr.mxu0 0.0
    %624 = vmatpush1.msra.mxu0 0.0
    %625 = vmatprep.subr.mxu0 0.0
    %626 = vmatpush1.msra.mxu0 0.0
    %627 = vmatprep.subr.mxu0 0.0
    %628 = vmatpush1.msra.mxu0 0.0
    %629 = vmatprep.subr.mxu0 0.0
    %630 = vmatpush1.msra.mxu0 0.0
    %631 = vmatprep.subr.mxu0 0.0
    %632 = vmatpush1.msra.mxu0 0.0
    %633 = vmatprep.subr.mxu0 0.0
    %634 = vmatpush1.msra.mxu0 0.0
    %635 = vmatprep.subr.mxu0 0.0
    %636 = vmatpush1.msra.mxu0 0.0
    %637 = vmatprep.mubr.f32.mxu0 0.0
    %638 = vmatmul.mubr.f32.gmra.mrb[0].mxu0 %v571
    %v639 = vpop.f32.mrb[0].mxu0
    %v640 = vadd.f32 0.0, %v639
    %v641 = vpop.f32.mrb[0].mxu0
    %642 = vdwg.mxu0
    %v644 = vrot.slane %v640, 2
    %v646 = vadd.f32 %v225, %v644
    %v647 = vxor.u32 %v646, 2147483648
    %v648 = vmul.f32 %v647, 1.442695
    %v649 = vpow.pop %v648
    %v650 = vadd.f32 %v649, 1.0
    %v651 = vrcp.pop %v650
    %v652 = vmul.f32 1.0, %v651
    %v653 = vadd.f32 %v640, %v325
    %v655 = vrot.slane %v653, 2
    %656 = vrot.lane.b32.xlu0 %v655, 64
    %v657 = vpop.permute.xlu0 %656
    %v659 = vmul.f32 %v652, %v657
    %661 = vrot.lane.b32.xlu0 %v659, 64
    %v662 = vpop.permute.xlu0 %661
    %v664 = vadd.f32 %v225, %v662
    %v665 = vtanh.pop %v664
    %v666 = vsub.f32 1.0, %v652
    %668 = vrot.lane.b32.xlu0 %v665, 96
    %v669 = vpop.permute.xlu0 %668
    %v671 = vmul.f32 %v666, %v669
    %v672 = vrot.slane %v566, 6
    %v674 = vmul.f32 %v652, %v672
    %v675 = vadd.f32 %v671, %v674
    %v677 = vrot.slane %v675, 6
    %678 = vrot.lane.b32.xlu0 %v677, 96
    %v679 = vpop.permute.xlu0 %678
    %v680 = vsel %vm151, %v679, 0
    %682 = vmatprep.subr.mxu0 0.0
    %683 = vmatpush1.msra.mxu0 %v233
    %684 = vmatprep.subr.mxu0 0.0
    %685 = vmatpush1.msra.mxu0 %v234
    %686 = vmatprep.subr.mxu0 0.0
    %687 = vmatpush1.msra.mxu0 %v235
    %688 = vmatprep.subr.mxu0 0.0
    %689 = vmatpush1.msra.mxu0 %v236
    %690 = vmatprep.subr.mxu0 0.0
    %691 = vmatpush1.msra.mxu0 0.0
    %692 = vmatprep.subr.mxu0 0.0
    %693 = vmatpush1.msra.mxu0 0.0
    %694 = vmatprep.subr.mxu0 0.0
    %695 = vmatpush1.msra.mxu0 0.0
    %696 = vmatprep.subr.mxu0 0.0
    %697 = vmatpush1.msra.mxu0 0.0
    %698 = vmatprep.subr.mxu0 0.0
    %699 = vmatpush1.msra.mxu0 0.0
    %700 = vmatprep.subr.mxu0 0.0
    %701 = vmatpush1.msra.mxu0 0.0
    %702 = vmatprep.subr.mxu0 0.0
    %703 = vmatpush1.msra.mxu0 0.0
    %704 = vmatprep.subr.mxu0 0.0
    %705 = vmatpush1.msra.mxu0 0.0
    %706 = vmatprep.subr.mxu0 0.0
    %707 = vmatpush1.msra.mxu0 0.0
    %708 = vmatprep.subr.mxu0 0.0
    %709 = vmatpush1.msra.mxu0 0.0
    %710 = vmatprep.subr.mxu0 0.0
    %711 = vmatpush1.msra.mxu0 0.0
    %712 = vmatprep.subr.mxu0 0.0
    %713 = vmatpush1.msra.mxu0 0.0
    %714 = vmatprep.subr.mxu0 0.0
    %715 = vmatpush1.msra.mxu0 0.0
    %716 = vmatprep.subr.mxu0 0.0
    %717 = vmatpush1.msra.mxu0 0.0
    %718 = vmatprep.subr.mxu0 0.0
    %719 = vmatpush1.msra.mxu0 0.0
    %720 = vmatprep.subr.mxu0 0.0
    %721 = vmatpush1.msra.mxu0 0.0
    %722 = vmatprep.subr.mxu0 0.0
    %723 = vmatpush1.msra.mxu0 0.0
    %724 = vmatprep.subr.mxu0 0.0
    %725 = vmatpush1.msra.mxu0 0.0
    %726 = vmatprep.subr.mxu0 0.0
    %727 = vmatpush1.msra.mxu0 0.0
    %728 = vmatprep.subr.mxu0 0.0
    %729 = vmatpush1.msra.mxu0 0.0
    %730 = vmatprep.subr.mxu0 0.0
    %731 = vmatpush1.msra.mxu0 0.0
    %732 = vmatprep.subr.mxu0 0.0
    %733 = vmatpush1.msra.mxu0 0.0
    %734 = vmatprep.subr.mxu0 0.0
    %735 = vmatpush1.msra.mxu0 0.0
    %736 = vmatprep.subr.mxu0 0.0
    %737 = vmatpush1.msra.mxu0 0.0
    %738 = vmatprep.subr.mxu0 0.0
    %739 = vmatpush1.msra.mxu0 0.0
    %740 = vmatprep.subr.mxu0 0.0
    %741 = vmatpush1.msra.mxu0 0.0
    %742 = vmatprep.subr.mxu0 0.0
    %743 = vmatpush1.msra.mxu0 0.0
    %744 = vmatprep.subr.mxu0 0.0
    %745 = vmatpush1.msra.mxu0 0.0
    %746 = vmatprep.mubr.f32.mxu0 0.0
    %747 = vmatmul.mubr.f32.gmra.mrb[0].mxu0 %v680
    %v748 = vpop.f32.mrb[0].mxu0
    %v749 = vadd.f32 0.0, %v748
    %v750 = vpop.f32.mrb[0].mxu0
    %751 = vdwg.mxu0
    %v752 = vadd.f32 %v230, %v749
    %v753 = vxor.u32 %v752, 2147483648
    %v754 = vmul.f32 %v753, 1.442695
    %v755 = vpow.pop %v754
    %v756 = vadd.f32 %v755, 1.0
    %v757 = vrcp.pop %v756
    %v758 = vmul.f32 1.0, %v757
    %v759 = vadd.f32 %v749, %v325
    %761 = vrot.lane.b32.xlu0 %v759, 64
    %v762 = vpop.permute.xlu0 %761
    %v764 = vmul.f32 %v758, %v762
    %766 = vrot.lane.b32.xlu0 %v764, 64
    %v767 = vpop.permute.xlu0 %766
    %v769 = vadd.f32 %v230, %v767
    %v770 = vtanh.pop %v769
    %v771 = vsub.f32 1.0, %v758
    %773 = vrot.lane.b32.xlu0 %v770, 96
    %v774 = vpop.permute.xlu0 %773
    %v776 = vmul.f32 %v771, %v774
    %v778 = vmul.f32 %v758, %v677
    %v779 = vadd.f32 %v776, %v778
    %781 = vrot.lane.b32.xlu0 %v779, 96
    %v782 = vpop.permute.xlu0 %781
    %v783 = vsel %vm151, %v782, 0
    %785 = vmatprep.subr.mxu0 0.0
    %786 = vmatpush1.msra.mxu0 %v233
    %787 = vmatprep.subr.mxu0 0.0
    %788 = vmatpush1.msra.mxu0 %v234
    %789 = vmatprep.subr.mxu0 0.0
    %790 = vmatpush1.msra.mxu0 %v235
    %791 = vmatprep.subr.mxu0 0.0
    %792 = vmatpush1.msra.mxu0 %v236
    %793 = vmatprep.subr.mxu0 0.0
    %794 = vmatpush1.msra.mxu0 0.0
    %795 = vmatprep.subr.mxu0 0.0
    %796 = vmatpush1.msra.mxu0 0.0
    %797 = vmatprep.subr.mxu0 0.0
    %798 = vmatpush1.msra.mxu0 0.0
    %799 = vmatprep.subr.mxu0 0.0
    %800 = vmatpush1.msra.mxu0 0.0
    %801 = vmatprep.subr.mxu0 0.0
    %802 = vmatpush1.msra.mxu0 0.0
    %803 = vmatprep.subr.mxu0 0.0
    %804 = vmatpush1.msra.mxu0 0.0
    %805 = vmatprep.subr.mxu0 0.0
    %806 = vmatpush1.msra.mxu0 0.0
    %807 = vmatprep.subr.mxu0 0.0
    %808 = vmatpush1.msra.mxu0 0.0
    %809 = vmatprep.subr.mxu0 0.0
    %810 = vmatpush1.msra.mxu0 0.0
    %811 = vmatprep.subr.mxu0 0.0
    %812 = vmatpush1.msra.mxu0 0.0
    %813 = vmatprep.subr.mxu0 0.0
    %814 = vmatpush1.msra.mxu0 0.0
    %815 = vmatprep.subr.mxu0 0.0
    %816 = vmatpush1.msra.mxu0 0.0
    %817 = vmatprep.subr.mxu0 0.0
    %818 = vmatpush1.msra.mxu0 0.0
    %819 = vmatprep.subr.mxu0 0.0
    %820 = vmatpush1.msra.mxu0 0.0
    %821 = vmatprep.subr.mxu0 0.0
    %822 = vmatpush1.msra.mxu0 0.0
    %823 = vmatprep.subr.mxu0 0.0
    %824 = vmatpush1.msra.mxu0 0.0
    %825 = vmatprep.subr.mxu0 0.0
    %826 = vmatpush1.msra.mxu0 0.0
    %827 = vmatprep.subr.mxu0 0.0
    %828 = vmatpush1.msra.mxu0 0.0
    %829 = vmatprep.subr.mxu0 0.0
    %830 = vmatpush1.msra.mxu0 0.0
    %831 = vmatprep.subr.mxu0 0.0
    %832 = vmatpush1.msra.mxu0 0.0
    %833 = vmatprep.subr.mxu0 0.0
    %834 = vmatpush1.msra.mxu0 0.0
    %835 = vmatprep.subr.mxu0 0.0
    %836 = vmatpush1.msra.mxu0 0.0
    %837 = vmatprep.subr.mxu0 0.0
    %838 = vmatpush1.msra.mxu0 0.0
    %839 = vmatprep.subr.mxu0 0.0
    %840 = vmatpush1.msra.mxu0 0.0
    %841 = vmatprep.subr.mxu0 0.0
    %842 = vmatpush1.msra.mxu0 0.0
    %843 = vmatprep.subr.mxu0 0.0
    %844 = vmatpush1.msra.mxu0 0.0
    %845 = vmatprep.subr.mxu0 0.0
    %846 = vmatpush1.msra.mxu0 0.0
    %847 = vmatprep.subr.mxu0 0.0
    %848 = vmatpush1.msra.mxu0 0.0
    %849 = vmatprep.mubr.f32.mxu0 0.0
    %850 = vmatmul.mubr.f32.gmra.mrb[0].mxu0 %v783
    %v851 = vpop.f32.mrb[0].mxu0
    %v852 = vadd.f32 0.0, %v851
    %v853 = vpop.f32.mrb[0].mxu0
    %854 = vdwg.mxu0
    %v856 = vrot.slane %v852, 6
    %v858 = vadd.f32 %v230, %v856
    %v859 = vxor.u32 %v858, 2147483648
    %v860 = vmul.f32 %v859, 1.442695
    %v861 = vpow.pop %v860
    %v862 = vadd.f32 %v861, 1.0
    %v863 = vrcp.pop %v862
    %v864 = vmul.f32 1.0, %v863
    %v865 = vadd.f32 %v852, %v325
    %v867 = vrot.slane %v865, 6
    %868 = vrot.lane.b32.xlu0 %v867, 64
    %v869 = vpop.permute.xlu0 %868
    %v871 = vmul.f32 %v864, %v869
    %873 = vrot.lane.b32.xlu0 %v871, 64
    %v874 = vpop.permute.xlu0 %873
    %v876 = vadd.f32 %v230, %v874
    %v877 = vtanh.pop %v876
    %v878 = vsub.f32 1.0, %v864
    %880 = vrot.lane.b32.xlu0 %v877, 96
    %v881 = vpop.permute.xlu0 %880
    %v883 = vmul.f32 %v878, %v881
    %v884 = vrot.slane %v779, 6
    %v886 = vmul.f32 %v864, %v884
    %v887 = vadd.f32 %v883, %v886
    %v889 = vrot.slane %v887, 2
    %890 = vrot.lane.b32.xlu0 %v889, 96
    %v891 = vpop.permute.xlu0 %890
    %v892 = vsel %vm151, %v891, 0
    %894 = vmatprep.subr.mxu0 0.0
    %895 = vmatpush1.msra.mxu0 %v233
    %896 = vmatprep.subr.mxu0 0.0
    %897 = vmatpush1.msra.mxu0 %v234
    %898 = vmatprep.subr.mxu0 0.0
    %899 = vmatpush1.msra.mxu0 %v235
    %900 = vmatprep.subr.mxu0 0.0
    %901 = vmatpush1.msra.mxu0 %v236
    %902 = vmatprep.subr.mxu0 0.0
    %903 = vmatpush1.msra.mxu0 0.0
    %904 = vmatprep.subr.mxu0 0.0
    %905 = vmatpush1.msra.mxu0 0.0
    %906 = vmatprep.subr.mxu0 0.0
    %907 = vmatpush1.msra.mxu0 0.0
    %908 = vmatprep.subr.mxu0 0.0
    %909 = vmatpush1.msra.mxu0 0.0
    %910 = vmatprep.subr.mxu0 0.0
    %911 = vmatpush1.msra.mxu0 0.0
    %912 = vmatprep.subr.mxu0 0.0
    %913 = vmatpush1.msra.mxu0 0.0
    %914 = vmatprep.subr.mxu0 0.0
    %915 = vmatpush1.msra.mxu0 0.0
    %916 = vmatprep.subr.mxu0 0.0
    %917 = vmatpush1.msra.mxu0 0.0
    %918 = vmatprep.subr.mxu0 0.0
    %919 = vmatpush1.msra.mxu0 0.0
    %920 = vmatprep.subr.mxu0 0.0
    %921 = vmatpush1.msra.mxu0 0.0
    %922 = vmatprep.subr.mxu0 0.0
    %923 = vmatpush1.msra.mxu0 0.0
    %924 = vmatprep.subr.mxu0 0.0
    %925 = vmatpush1.msra.mxu0 0.0
    %926 = vmatprep.subr.mxu0 0.0
    %927 = vmatpush1.msra.mxu0 0.0
    %928 = vmatprep.subr.mxu0 0.0
    %929 = vmatpush1.msra.mxu0 0.0
    %930 = vmatprep.subr.mxu0 0.0
    %931 = vmatpush1.msra.mxu0 0.0
    %932 = vmatprep.subr.mxu0 0.0
    %933 = vmatpush1.msra.mxu0 0.0
    %934 = vmatprep.subr.mxu0 0.0
    %935 = vmatpush1.msra.mxu0 0.0
    %936 = vmatprep.subr.mxu0 0.0
    %937 = vmatpush1.msra.mxu0 0.0
    %938 = vmatprep.subr.mxu0 0.0
    %939 = vmatpush1.msra.mxu0 0.0
    %940 = vmatprep.subr.mxu0 0.0
    %941 = vmatpush1.msra.mxu0 0.0
    %942 = vmatprep.subr.mxu0 0.0
    %943 = vmatpush1.msra.mxu0 0.0
    %944 = vmatprep.subr.mxu0 0.0
    %945 = vmatpush1.msra.mxu0 0.0
    %946 = vmatprep.subr.mxu0 0.0
    %947 = vmatpush1.msra.mxu0 0.0
    %948 = vmatprep.subr.mxu0 0.0
    %949 = vmatpush1.msra.mxu0 0.0
    %950 = vmatprep.subr.mxu0 0.0
    %951 = vmatpush1.msra.mxu0 0.0
    %952 = vmatprep.subr.mxu0 0.0
    %953 = vmatpush1.msra.mxu0 0.0
    %954 = vmatprep.subr.mxu0 0.0
    %955 = vmatpush1.msra.mxu0 0.0
    %956 = vmatprep.subr.mxu0 0.0
    %957 = vmatpush1.msra.mxu0 0.0
    %958 = vmatprep.mubr.f32.mxu0 0.0
    %959 = vmatmul.mubr.f32.gmra.mrb[0].mxu0 %v892
    %v960 = vpop.f32.mrb[0].mxu0
    %v961 = vadd.f32 0.0, %v960
    %v962 = vpop.f32.mrb[0].mxu0
    %963 = vdwg.mxu0
    %v965 = vrot.slane %v961, 4
    %v967 = vadd.f32 %v230, %v965
    %v968 = vxor.u32 %v967, 2147483648
    %v969 = vmul.f32 %v968, 1.442695
    %v970 = vpow.pop %v969
    %v971 = vadd.f32 %v970, 1.0
    %v972 = vrcp.pop %v971
    %v973 = vmul.f32 1.0, %v972
    %v974 = vadd.f32 %v961, %v325
    %v976 = vrot.slane %v974, 4
    %977 = vrot.lane.b32.xlu0 %v976, 64
    %v978 = vpop.permute.xlu0 %977
    %v980 = vmul.f32 %v973, %v978
    %982 = vrot.lane.b32.xlu0 %v980, 64
    %v983 = vpop.permute.xlu0 %982
    %v985 = vadd.f32 %v230, %v983
    %v986 = vtanh.pop %v985
    %v987 = vsub.f32 1.0, %v973
    %989 = vrot.lane.b32.xlu0 %v986, 96
    %v990 = vpop.permute.xlu0 %989
    %v992 = vmul.f32 %v987, %v990
    %v993 = vrot.slane %v887, 6
    %v995 = vmul.f32 %v973, %v993
    %v996 = vadd.f32 %v992, %v995
    %v998 = vrot.slane %v996, 4
    %999 = vrot.lane.b32.xlu0 %v998, 96
    %v1000 = vpop.permute.xlu0 %999
    %v1001 = vsel %vm151, %v1000, 0
    %1003 = vmatprep.subr.mxu0 0.0
    %1004 = vmatpush1.msra.mxu0 %v233
    %1005 = vmatprep.subr.mxu0 0.0
    %1006 = vmatpush1.msra.mxu0 %v234
    %1007 = vmatprep.subr.mxu0 0.0
    %1008 = vmatpush1.msra.mxu0 %v235
    %1009 = vmatprep.subr.mxu0 0.0
    %1010 = vmatpush1.msra.mxu0 %v236
    %1011 = vmatprep.subr.mxu0 0.0
    %1012 = vmatpush1.msra.mxu0 0.0
    %1013 = vmatprep.subr.mxu0 0.0
    %1014 = vmatpush1.msra.mxu0 0.0
    %1015 = vmatprep.subr.mxu0 0.0
    %1016 = vmatpush1.msra.mxu0 0.0
    %1017 = vmatprep.subr.mxu0 0.0
    %1018 = vmatpush1.msra.mxu0 0.0
    %1019 = vmatprep.subr.mxu0 0.0
    %1020 = vmatpush1.msra.mxu0 0.0
    %1021 = vmatprep.subr.mxu0 0.0
    %1022 = vmatpush1.msra.mxu0 0.0
    %1023 = vmatprep.subr.mxu0 0.0
    %1024 = vmatpush1.msra.mxu0 0.0
    %1025 = vmatprep.subr.mxu0 0.0
    %1026 = vmatpush1.msra.mxu0 0.0
    %1027 = vmatprep.subr.mxu0 0.0
    %1028 = vmatpush1.msra.mxu0 0.0
    %1029 = vmatprep.subr.mxu0 0.0
    %1030 = vmatpush1.msra.mxu0 0.0
    %1031 = vmatprep.subr.mxu0 0.0
    %1032 = vmatpush1.msra.mxu0 0.0
    %1033 = vmatprep.subr.mxu0 0.0
    %1034 = vmatpush1.msra.mxu0 0.0
    %1035 = vmatprep.subr.mxu0 0.0
    %1036 = vmatpush1.msra.mxu0 0.0
    %1037 = vmatprep.subr.mxu0 0.0
    %1038 = vmatpush1.msra.mxu0 0.0
    %1039 = vmatprep.subr.mxu0 0.0
    %1040 = vmatpush1.msra.mxu0 0.0
    %1041 = vmatprep.subr.mxu0 0.0
    %1042 = vmatpush1.msra.mxu0 0.0
    %1043 = vmatprep.subr.mxu0 0.0
    %1044 = vmatpush1.msra.mxu0 0.0
    %1045 = vmatprep.subr.mxu0 0.0
    %1046 = vmatpush1.msra.mxu0 0.0
    %1047 = vmatprep.subr.mxu0 0.0
    %1048 = vmatpush1.msra.mxu0 0.0
    %1049 = vmatprep.subr.mxu0 0.0
    %1050 = vmatpush1.msra.mxu0 0.0
    %1051 = vmatprep.subr.mxu0 0.0
    %1052 = vmatpush1.msra.mxu0 0.0
    %1053 = vmatprep.subr.mxu0 0.0
    %1054 = vmatpush1.msra.mxu0 0.0
    %1055 = vmatprep.subr.mxu0 0.0
    %1056 = vmatpush1.msra.mxu0 0.0
    %1057 = vmatprep.subr.mxu0 0.0
    %1058 = vmatpush1.msra.mxu0 0.0
    %1059 = vmatprep.subr.mxu0 0.0
    %1060 = vmatpush1.msra.mxu0 0.0
    %1061 = vmatprep.subr.mxu0 0.0
    %1062 = vmatpush1.msra.mxu0 0.0
    %1063 = vmatprep.subr.mxu0 0.0
    %1064 = vmatpush1.msra.mxu0 0.0
    %1065 = vmatprep.subr.mxu0 0.0
    %1066 = vmatpush1.msra.mxu0 0.0
    %1067 = vmatprep.mubr.f32.mxu0 0.0
    %1068 = vmatmul.mubr.f32.gmra.mrb[0].mxu0 %v1001
    %v1069 = vpop.f32.mrb[0].mxu0
    %v1070 = vadd.f32 0.0, %v1069
    %v1071 = vpop.f32.mrb[0].mxu0
    %1072 = vdwg.mxu0
    %v1074 = vrot.slane %v1070, 2
    %v1076 = vadd.f32 %v230, %v1074
    %v1077 = vxor.u32 %v1076, 2147483648
    %v1078 = vmul.f32 %v1077, 1.442695
    %v1079 = vpow.pop %v1078
    %v1080 = vadd.f32 %v1079, 1.0
    %v1081 = vrcp.pop %v1080
    %v1082 = vmul.f32 1.0, %v1081
    %v1083 = vadd.f32 %v1070, %v325
    %v1085 = vrot.slane %v1083, 2
    %1086 = vrot.lane.b32.xlu0 %v1085, 64
    %v1087 = vpop.permute.xlu0 %1086
    %v1089 = vmul.f32 %v1082, %v1087
    %1091 = vrot.lane.b32.xlu0 %v1089, 64
    %v1092 = vpop.permute.xlu0 %1091
    %v1094 = vadd.f32 %v230, %v1092
    %v1095 = vtanh.pop %v1094
    %v1096 = vsub.f32 1.0, %v1082
    %1098 = vrot.lane.b32.xlu0 %v1095, 96
    %v1099 = vpop.permute.xlu0 %1098
    %v1101 = vmul.f32 %v1096, %v1099
    %v1102 = vrot.slane %v996, 6
    %v1104 = vmul.f32 %v1082, %v1102
    %v1105 = vadd.f32 %v1101, %v1104
    %1107 = vrot.lane.b32.xlu0 %v1105, 96
    %v1108 = vpop.permute.xlu0 %1107
    %vm1110 = vcmask 261126
    %1111 = vst.msk [vmem:[#allocation2 - $0x6] sm:$0xc0] %vm1110, %v1108
    %vm1112 = vcmask 1041408
    %v1113 = vsel %vm1112, %v349, %v457
    %vm1114 = vcmask 1043456
    %v1115 = vsel %vm1114, %v1113, %v566
    %vm1116 = vcmask 1045504
    %v1117 = vsel %vm1116, %v1115, %v675
    %v1118 = vsel %vm1112, %v779, %v887
    %v1119 = vsel %vm1114, %v1118, %v996
    %v1120 = vsel %vm1116, %v1119, %v1105
    %v1121 = vld [vmem:[%s8] sm:$0xff]
    %v1122 = vld [vmem:[%s8 + $0x8] sm:$0xff]
    %v1123 = vld [vmem:[%s8 + $0x10] sm:$0xff]
    %v1124 = vld [vmem:[%s8 + $0x18] sm:$0xff]
    %v1125 = vld [vmem:[%s9] sm:$0x1]
    %v1127 = vlaneseq
    %v1128 = vshrl.u32 %v1127, 7
    %v1129 = vsub.s32 0, %v1128
    %v1130 = vrot.slane %v1125, %v1129
    %1134 = vrot.lane.b32.xlu0 %v1117, 96
    %v1135 = vpop.permute.xlu0 %1134
    %1136 = vrot.lane.b32.xlu0 %v1120, 96
    %v1137 = vpop.permute.xlu0 %1136
    %v1138 = vsel %vm151, %v1135, 0
    %v1140 = vsel %vm151, %v1137, 0
    %1142 = vmatprep.subr.mxu0 0.0
    %1143 = vmatpush1.msra.mxu0 %v1121
    %1144 = vmatprep.subr.mxu0 0.0
    %1145 = vmatpush1.msra.mxu0 %v1122
    %1146 = vmatprep.subr.mxu0 0.0
    %1147 = vmatpush1.msra.mxu0 %v1123
    %1148 = vmatprep.subr.mxu0 0.0
    %1149 = vmatpush1.msra.mxu0 %v1124
    %1150 = vmatprep.subr.mxu0 0.0
    %1151 = vmatpush1.msra.mxu0 0.0
    %1152 = vmatprep.subr.mxu0 0.0
    %1153 = vmatpush1.msra.mxu0 0.0
    %1154 = vmatprep.subr.mxu0 0.0
    %1155 = vmatpush1.msra.mxu0 0.0
    %1156 = vmatprep.subr.mxu0 0.0
    %1157 = vmatpush1.msra.mxu0 0.0
    %1158 = vmatprep.subr.mxu0 0.0
    %1159 = vmatpush1.msra.mxu0 0.0
    %1160 = vmatprep.subr.mxu0 0.0
    %1161 = vmatpush1.msra.mxu0 0.0
    %1162 = vmatprep.subr.mxu0 0.0
    %1163 = vmatpush1.msra.mxu0 0.0
    %1164 = vmatprep.subr.mxu0 0.0
    %1165 = vmatpush1.msra.mxu0 0.0
    %1166 = vmatprep.subr.mxu0 0.0
    %1167 = vmatpush1.msra.mxu0 0.0
    %1168 = vmatprep.subr.mxu0 0.0
    %1169 = vmatpush1.msra.mxu0 0.0
    %1170 = vmatprep.subr.mxu0 0.0
    %1171 = vmatpush1.msra.mxu0 0.0
    %1172 = vmatprep.subr.mxu0 0.0
    %1173 = vmatpush1.msra.mxu0 0.0
    %1174 = vmatprep.subr.mxu0 0.0
    %1175 = vmatpush1.msra.mxu0 0.0
    %1176 = vmatprep.subr.mxu0 0.0
    %1177 = vmatpush1.msra.mxu0 0.0
    %1178 = vmatprep.subr.mxu0 0.0
    %1179 = vmatpush1.msra.mxu0 0.0
    %1180 = vmatprep.subr.mxu0 0.0
    %1181 = vmatpush1.msra.mxu0 0.0
    %1182 = vmatprep.subr.mxu0 0.0
    %1183 = vmatpush1.msra.mxu0 0.0
    %1184 = vmatprep.subr.mxu0 0.0
    %1185 = vmatpush1.msra.mxu0 0.0
    %1186 = vmatprep.subr.mxu0 0.0
    %1187 = vmatpush1.msra.mxu0 0.0
    %1188 = vmatprep.subr.mxu0 0.0
    %1189 = vmatpush1.msra.mxu0 0.0
    %1190 = vmatprep.subr.mxu0 0.0
    %1191 = vmatpush1.msra.mxu0 0.0
    %1192 = vmatprep.subr.mxu0 0.0
    %1193 = vmatpush1.msra.mxu0 0.0
    %1194 = vmatprep.subr.mxu0 0.0
    %1195 = vmatpush1.msra.mxu0 0.0
    %1196 = vmatprep.subr.mxu0 0.0
    %1197 = vmatpush1.msra.mxu0 0.0
    %1198 = vmatprep.subr.mxu0 0.0
    %1199 = vmatpush1.msra.mxu0 0.0
    %1200 = vmatprep.subr.mxu0 0.0
    %1201 = vmatpush1.msra.mxu0 0.0
    %1202 = vmatprep.subr.mxu0 0.0
    %1203 = vmatpush1.msra.mxu0 0.0
    %1204 = vmatprep.subr.mxu0 0.0
    %1205 = vmatpush1.msra.mxu0 0.0
    %1206 = vmatprep.mubr.f32.mxu0 0.0
    %1207 = vmatmul.mubr.f32.gmra.mrb[0].mxu0 %v1138
    %v1208 = vpop.f32.mrb[0].mxu0
    %v1209 = vadd.f32 %v1130, %v1208
    %v1210 = vpop.f32.mrb[0].mxu0
    %1211 = vmatprep.mubr.f32.mxu0 0.0
    %1212 = vmatmul.mubr.f32.gmra.mrb[0].mxu0 %v1140
    %v1213 = vpop.f32.mrb[0].mxu0
    %v1214 = vadd.f32 %v1130, %v1213
    %v1215 = vpop.f32.mrb[0].mxu0
    %1216 = vdwg.mxu0
    %v1217 = vtanh.pop %v1209
    %v1218 = vtanh.pop %v1214
    %v1219 = vld [vmem:[%s10] sm:$0xff]
    %v1220 = vld [vmem:[%s10 + $0x8] sm:$0xff]
    %v1221 = vld [vmem:[%s10 + $0x10] sm:$0xff]
    %v1222 = vld [vmem:[%s10 + $0x18] sm:$0xff]
    %v1223 = vld [vmem:[%s11] sm:$0x1]
    %v1225 = vlaneseq
    %v1226 = vshrl.u32 %v1225, 7
    %v1227 = vsub.s32 0, %v1226
    %v1228 = vrot.slane %v1223, %v1227
    %v1231 = vsel %vm151, %v1217, 0
    %v1234 = vsel %vm151, %v1218, 0
    %1236 = vmatprep.subr.mxu0 0.0
    %1237 = vmatpush1.msra.mxu0 %v1219
    %1238 = vmatprep.subr.mxu0 0.0
    %1239 = vmatpush1.msra.mxu0 %v1220
    %1240 = vmatprep.subr.mxu0 0.0
    %1241 = vmatpush1.msra.mxu0 %v1221
    %1242 = vmatprep.subr.mxu0 0.0
    %1243 = vmatpush1.msra.mxu0 %v1222
    %1244 = vmatprep.subr.mxu0 0.0
    %1245 = vmatpush1.msra.mxu0 0.0
    %1246 = vmatprep.subr.mxu0 0.0
    %1247 = vmatpush1.msra.mxu0 0.0
    %1248 = vmatprep.subr.mxu0 0.0
    %1249 = vmatpush1.msra.mxu0 0.0
    %1250 = vmatprep.subr.mxu0 0.0
    %1251 = vmatpush1.msra.mxu0 0.0
    %1252 = vmatprep.subr.mxu0 0.0
    %1253 = vmatpush1.msra.mxu0 0.0
    %1254 = vmatprep.subr.mxu0 0.0
    %1255 = vmatpush1.msra.mxu0 0.0
    %1256 = vmatprep.subr.mxu0 0.0
    %1257 = vmatpush1.msra.mxu0 0.0
    %1258 = vmatprep.subr.mxu0 0.0
    %1259 = vmatpush1.msra.mxu0 0.0
    %1260 = vmatprep.subr.mxu0 0.0
    %1261 = vmatpush1.msra.mxu0 0.0
    %1262 = vmatprep.subr.mxu0 0.0
    %1263 = vmatpush1.msra.mxu0 0.0
    %1264 = vmatprep.subr.mxu0 0.0
    %1265 = vmatpush1.msra.mxu0 0.0
    %1266 = vmatprep.subr.mxu0 0.0
    %1267 = vmatpush1.msra.mxu0 0.0
    %1268 = vmatprep.subr.mxu0 0.0
    %1269 = vmatpush1.msra.mxu0 0.0
    %1270 = vmatprep.subr.mxu0 0.0
    %1271 = vmatpush1.msra.mxu0 0.0
    %1272 = vmatprep.subr.mxu0 0.0
    %1273 = vmatpush1.msra.mxu0 0.0
    %1274 = vmatprep.subr.mxu0 0.0
    %1275 = vmatpush1.msra.mxu0 0.0
    %1276 = vmatprep.subr.mxu0 0.0
    %1277 = vmatpush1.msra.mxu0 0.0
    %1278 = vmatprep.subr.mxu0 0.0
    %1279 = vmatpush1.msra.mxu0 0.0
    %1280 = vmatprep.subr.mxu0 0.0
    %1281 = vmatpush1.msra.mxu0 0.0
    %1282 = vmatprep.subr.mxu0 0.0
    %1283 = vmatpush1.msra.mxu0 0.0
    %1284 = vmatprep.subr.mxu0 0.0
    %1285 = vmatpush1.msra.mxu0 0.0
    %1286 = vmatprep.subr.mxu0 0.0
    %1287 = vmatpush1.msra.mxu0 0.0
    %1288 = vmatprep.subr.mxu0 0.0
    %1289 = vmatpush1.msra.mxu0 0.0
    %1290 = vmatprep.subr.mxu0 0.0
    %1291 = vmatpush1.msra.mxu0 0.0
    %1292 = vmatprep.subr.mxu0 0.0
    %1293 = vmatpush1.msra.mxu0 0.0
    %1294 = vmatprep.subr.mxu0 0.0
    %1295 = vmatpush1.msra.mxu0 0.0
    %1296 = vmatprep.subr.mxu0 0.0
    %1297 = vmatpush1.msra.mxu0 0.0
    %1298 = vmatprep.subr.mxu0 0.0
    %1299 = vmatpush1.msra.mxu0 0.0
    %1300 = vmatprep.mubr.f32.mxu0 0.0
    %1301 = vmatmul.mubr.f32.gmra.mrb[0].mxu0 %v1231
    %v1302 = vpop.f32.mrb[0].mxu0
    %v1303 = vadd.f32 %v1228, %v1302
    %v1304 = vpop.f32.mrb[0].mxu0
    %1305 = vmatprep.mubr.f32.mxu0 0.0
    %1306 = vmatmul.mubr.f32.gmra.mrb[0].mxu0 %v1234
    %v1307 = vpop.f32.mrb[0].mxu0
    %v1308 = vadd.f32 %v1228, %v1307
    %v1309 = vpop.f32.mrb[0].mxu0
    %1310 = vdwg.mxu0
    %v1311 = vtanh.pop %v1303
    %v1312 = vtanh.pop %v1308
    %vm1313 = vcmask 31744
    %1314 = vst.msk [vmem:[%s12] sm:$0xff] %vm1313, %v1311
    %1315 = vst.msk [vmem:[%s12 + $0x8] sm:$0xff] %vm1313, %v1312
    // Predicated region
    $region50: #{gaussian_actor_forward.1} parent=1 // pred_check
      _
    $region51: #{gaussian_actor_forward.1} parent=1 // pred_check_branch
      %1317 = sbr.rel (0) target = $region53
    $region52: #{gaussian_actor_forward.1} parent=1 // pred_region
      _
    $region53: #{gaussian_actor_forward.1} parent=1 // pred_fallthru
      _
    // Predicated region
    $region54: #{gaussian_actor_forward.1} parent=1 // pred_check
      _
    $region55: #{gaussian_actor_forward.1} parent=1 // pred_check_branch
      %1319 = sbr.rel (0) target = $region57
    $region56: #{gaussian_actor_forward.1} parent=1 // pred_region
      %s1321 = ssub.s32 32, 32
      %1322 = vsyncadd [#allocation3], %s1321
      %s1324 = sshll.u32 [#allocation2], 4
      %s1325 = int_to_ptr.vmem [resolvable:$true] %s1324
      %1327 = dma.vmem_to_hbm [thread:$0]  %s1325, 32, %s13, [#allocation3]
    $region57: #{gaussian_actor_forward.1} parent=1 // pred_fallthru
      _
    // Predicated region
    $region58: #{gaussian_actor_forward.1} parent=1 // pred_check
      _
    $region59: #{gaussian_actor_forward.1} parent=1 // pred_check_branch
      %1329 = sbr.rel (0) target = $region61
    $region60: #{gaussian_actor_forward.1} parent=1 // pred_region
      _
    $region61: #{gaussian_actor_forward.1} parent=1 // pred_fallthru
      _
    // Predicated region
    $region62: #{gaussian_actor_forward.1} parent=1 // pred_check
      _
    $region63: #{gaussian_actor_forward.1} parent=1 // pred_check_branch
      %1331 = sbr.rel (0) target = $region65
    $region64: #{gaussian_actor_forward.1} parent=1 // pred_region
      %1332 = dma.done [#allocation3], 32
    $region65: #{gaussian_actor_forward.1} parent=1 // pred_fallthru
      _
    %1333 = vsyncpa [#allocation3], 1

</llo_original>
